<compile_context>
chip_gen: v6e
topology: v6e:2x2x1
jax: 0.10.0
libtpu: 0.0.40
codegen_flags: <defaults>
</compile_context>

<pallas_src>
import functools

import jax
import jax.numpy as jnp
import numpy as np
from jax.experimental import pallas as pl
from jax.experimental.pallas import tpu as pltpu

_MIB = 1024 * 1024


# ----------------------------------------------------------------------------
# Fused kernel: 3x3 depthwise conv + BN + ReLU6  ->  1x1 pointwise + BN + ReLU6
# ----------------------------------------------------------------------------
def _fused_dw_pw_kernel(x_ref, dww_ref, dwb_ref, pww_ref, pwb_ref, o_ref, xp_ref,
                        *, H, W, C, Cout, TH):
    # x_ref  : (1, H, W, C)      whole NHWC image, resident in VMEM across the row-tile axis
    # dww_ref: (3, 3, C)         depthwise taps (BN scale pre-folded)
    # dwb_ref: (1, C)            depthwise BN bias
    # pww_ref: (Cout, C)         pointwise weight (BN scale pre-folded into rows)
    # pwb_ref: (Cout, 1)         pointwise BN bias
    # o_ref  : (1, Cout, TH*W)   lane-dense output tile (flattened spatial on lanes)
    # xp_ref : (TH+2, W+2, C)    VMEM scratch: zero-padded halo slab for THIS row tile only
    r = pl.program_id(1)
    n_row_tiles = pl.num_programs(1)
    row0 = pl.multiple_of(r * TH, TH)

    # ---- build only the (TH+2, W+2, C) halo slab (no full-image re-copy per step) ----
    # zero just the 1-px left/right border columns; the interior is overwritten below
    zcol = jnp.zeros((TH + 2, 1, C), jnp.float32)
    xp_ref[:, pl.ds(0, 1), :] = zcol
    xp_ref[:, pl.ds(W + 1, 1), :] = zcol

    # top / bottom halo rows: clamped source row, masked to zero at the image edges
    top_src = jnp.maximum(row0 - 1, 0)
    bot_src = jnp.minimum(row0 + TH, H - 1)
    top_mask = (r > 0).astype(jnp.float32)
    bot_mask = (r + 1 < n_row_tiles).astype(jnp.float32)
    top_row = x_ref[0, pl.ds(top_src, 1), :, :].astype(jnp.float32)
    bot_row = x_ref[0, pl.ds(bot_src, 1), :, :].astype(jnp.float32)
    xp_ref[pl.ds(0, 1), pl.ds(1, W), :] = top_row * top_mask
    xp_ref[pl.ds(TH + 1, 1), pl.ds(1, W), :] = bot_row * bot_mask

    # interior rows of this tile
    xp_ref[pl.ds(1, TH), pl.ds(1, W), :] = x_ref[0, pl.ds(row0, TH), :, :].astype(jnp.float32)

    # ---- depthwise 3x3, stride 1 (BN scale already folded into the taps) ----
    # TODO(synk): for C < 128 the channels-on-lanes layout leaves most VPU lanes idle;
    # a (W*C)-on-lanes layout (pltpu.roll for the column shift) would lift VPU utilization.
    w = dww_ref[...]            # (3, 3, C)  loaded once
    dwb = dwb_ref[...]          # (1, C)
    acc = xp_ref[pl.ds(0, TH), pl.ds(0, W), :] * w[0, 0, :]
    for dh in range(3):
        for dw in range(3):
            if dh == 0 and dw == 0:
                continue
            acc = acc + xp_ref[pl.ds(dh, TH), pl.ds(dw, W), :] * w[dh, dw, :]
    y = jnp.clip(acc + dwb, 0.0, 6.0)                       # BN bias + ReLU6, (TH, W, C)

    # ---- fused 1x1 pointwise on the MXU; intermediate never leaves VMEM ----
    # TODO(synk): bf16 inputs to the dot (f32 accumulate) would be faster on v6e/v7x but
    # must be re-validated against the 1e-4 reference tolerance; kept f32 here.
    yf = y.reshape(TH * W, C)                               # lane dim (C) unchanged: cheap
    z = jax.lax.dot_general(pww_ref[...], yf,
                            (((1,), (1,)), ((), ())),       # (Cout,C) . (TH*W,C)^T
                            preferred_element_type=jnp.float32)  # -> (Cout, TH*W)
    z = jnp.clip(z + pwb_ref[...], 0.0, 6.0)
    o_ref[0] = z.astype(o_ref.dtype)


def _vmem_bytes(H, W, C, Cout, TH):
    f32 = 4
    return (2 * H * W * C * f32                        # double-buffered resident input image
            + 2 * Cout * TH * W * f32                  # double-buffered output tile
            + (TH + 2) * (W + 2) * C * f32             # halo-slab scratch
            + (3 * TH * W * C + Cout * TH * W) * f32   # rough in-register / temp headroom
            + (9 * C + C + Cout * C + Cout) * f32)     # weights / biases


def _pick_row_tile(H, W, C, Cout, budget_bytes):
    """Largest TH with H % TH == 0 and a lane-dense (TH*W % 128 == 0) store that fits VMEM."""
    cands = [th for th in range(H, 0, -1)
             if H % th == 0 and (th == H or (th * W) % 128 == 0)]
    for th in cands:                                   # largest first
        if _vmem_bytes(H, W, C, Cout, th) <= budget_bytes:
            return th
    # TODO(synk): for images too large to keep resident in VMEM (e.g. 224x224, large C, on
    # v7x's 64 MiB), switch the input to memory_space=pl.ANY and manually DMA
    # double-buffered (TH+2)-row halo slabs instead of keeping the whole image resident.
    return cands[-1]


def fused_depthwise_pointwise(x_nhwc, dw_w, dw_scale, dw_bias, pw_w, pw_scale, pw_bias):
    N, H, W, C = x_nhwc.shape
    Cout = pw_w.shape[0]
    TH = _pick_row_tile(H, W, C, Cout, budget_bytes=40 * _MIB)
    n_row_tiles = H // TH

    # Host-side weight-only BN-scale fold (NOT the "pre-scale inputs" anti-pattern):
    # removes two full-tensor VPU multiplies per grid step inside the kernel.
    dw_w_f = (dw_w * dw_scale.reshape(1, 1, C)).astype(jnp.float32)
    pw_w_f = (pw_w * pw_scale.reshape(Cout, 1)).astype(jnp.float32)

    est = _vmem_bytes(H, W, C, Cout, TH)
    # Per-generation-safe scoped-VMEM request: >= default, <= v7x physical (64 MiB).
    vmem_limit = int(min(64 * _MIB, max(32 * _MIB, 2 * est)))

    kernel = functools.partial(_fused_dw_pw_kernel, H=H, W=W, C=C, Cout=Cout, TH=TH)
    return pl.pallas_call(
        kernel,
        out_shape=jax.ShapeDtypeStruct((N, Cout, H * W), x_nhwc.dtype),
        grid_spec=pltpu.PrefetchScalarGridSpec(
            num_scalar_prefetch=0,
            grid=(N, n_row_tiles),
            in_specs=[
                pl.BlockSpec((1, H, W, C), lambda n, r: (n, 0, 0, 0)),  # fetched once/image
                pl.BlockSpec((3, 3, C), lambda n, r: (0, 0, 0)),
                pl.BlockSpec((1, C), lambda n, r: (0, 0)),
                pl.BlockSpec((Cout, C), lambda n, r: (0, 0)),
                pl.BlockSpec((Cout, 1), lambda n, r: (0, 0)),
            ],
            out_specs=pl.BlockSpec((1, Cout, TH * W), lambda n, r: (n, 0, r)),
            scratch_shapes=[pltpu.VMEM((TH + 2, W + 2, C), jnp.float32)],
        ),
        compiler_params=pltpu.CompilerParams(
            dimension_semantics=("parallel", "parallel"),
            vmem_limit_bytes=vmem_limit,
        ),
    )(x_nhwc, dw_w_f, dw_bias, pw_w_f, pw_bias)


# ----------------------------------------------------------------------------
# Full module forward (NCHW in / NCHW out, like the PyTorch module)
# ----------------------------------------------------------------------------
def depthwise_block_forward(x_nchw, params):
    N, C, H, W = x_nchw.shape
    Cout = params["pw_w"].shape[0]
    x_nhwc = jnp.transpose(x_nchw, (0, 2, 3, 1))     # NCHW -> NHWC (channels on lanes)
    out = fused_depthwise_pointwise(
        x_nhwc, params["dw_w"], params["dw_scale"], params["dw_bias"],
        params["pw_w"], params["pw_scale"], params["pw_bias"])
    # Kernel already emits channel-major (N, Cout, H*W): NCHW is a free reshape.
    return out.reshape(N, Cout, H, W)


def fold_bn(gamma, beta, mean, var, eps=1e-5):
    scale = gamma / jnp.sqrt(var + eps)
    bias = beta - mean * scale
    return scale, bias


def make_params(key, in_channels, out_channels):
    k = jax.random.split(key, 6)
    # depthwise conv weight: PyTorch (C, 1, 3, 3) -> ours (3, 3, C)
    dw_w = jax.random.normal(k[0], (3, 3, in_channels), jnp.float32) * 0.3
    # pointwise conv weight: PyTorch (O, C, 1, 1) -> ours (O, C)
    pw_w = jax.random.normal(k[1], (out_channels, in_channels), jnp.float32) * 0.3
    # BatchNorm params (deterministic, nontrivial), inference-mode fold
    dw_gamma = 1.0 + 0.1 * jax.random.normal(k[2], (in_channels,), jnp.float32)
    dw_beta = 0.05 * jax.random.normal(k[3], (in_channels,), jnp.float32)
    dw_mean = jnp.zeros((in_channels,), jnp.float32)
    dw_var = jnp.ones((in_channels,), jnp.float32)
    pw_gamma = 1.0 + 0.1 * jax.random.normal(k[4], (out_channels,), jnp.float32)
    pw_beta = 0.05 * jax.random.normal(k[5], (out_channels,), jnp.float32)
    pw_mean = jnp.zeros((out_channels,), jnp.float32)
    pw_var = jnp.ones((out_channels,), jnp.float32)
    dw_s, dw_b = fold_bn(dw_gamma, dw_beta, dw_mean, dw_var)
    pw_s, pw_b = fold_bn(pw_gamma, pw_beta, pw_mean, pw_var)
    return dict(dw_w=dw_w,
                dw_scale=dw_s[None, :], dw_bias=dw_b[None, :],       # (1, C)
                pw_w=pw_w,
                pw_scale=pw_s[:, None], pw_bias=pw_b[:, None])       # (Cout, 1)


# ----------------------------------------------------------------------------
# Pure-JAX reference (for correctness check)
# ----------------------------------------------------------------------------
def reference_forward(x_nchw, params):
    C = x_nchw.shape[1]
    x = jnp.transpose(x_nchw, (0, 2, 3, 1))
    y = jax.lax.conv_general_dilated(
        x, params["dw_w"].reshape(3, 3, 1, C),
        window_strides=(1, 1), padding="SAME",
        dimension_numbers=("NHWC", "HWIO", "NHWC"),
        feature_group_count=C)
    y = jnp.clip(y * params["dw_scale"][0] + params["dw_bias"][0], 0.0, 6.0)
    z = jnp.einsum("nhwc,oc->nhwo", y, params["pw_w"])
    z = jnp.clip(z * params["pw_scale"][:, 0] + params["pw_bias"][:, 0], 0.0, 6.0)
    return jnp.transpose(z, (0, 3, 1, 2))


if __name__ == "__main__":
    N, C_IN, C_OUT, H, W = 2, 8, 16, 16, 16
    key = jax.random.PRNGKey(0)
    kx, kp = jax.random.split(key)
    x = jax.random.normal(kx, (N, C_IN, H, W), jnp.float32)   # NCHW, like PyTorch
    params = make_params(kp, C_IN, C_OUT)

    out = depthwise_block_forward(x, params)
    out = jax.block_until_ready(out)
    assert out.shape == (N, C_OUT, H, W), out.shape

    ref = jax.block_until_ready(reference_forward(x, params))
    np.testing.assert_allclose(np.asarray(out), np.asarray(ref), rtol=1e-5, atol=1e-4)

    print("KERNEL_OK")
</pallas_src>

<mosaic_0001>
module attributes {stable_mosaic.version = 11 : i64} {
  func.func @_fused_dw_pw_kernel(%arg0: i32, %arg1: i32, %arg2: memref<1x16x16x8xf32, #tpu.memory_space<vmem>>, %arg3: memref<3x3x8xf32, #tpu.memory_space<vmem>>, %arg4: memref<1x8xf32, #tpu.memory_space<vmem>>, %arg5: memref<16x8xf32, #tpu.memory_space<vmem>>, %arg6: memref<16x1xf32, #tpu.memory_space<vmem>>, %arg7: memref<1x16x256xf32, #tpu.memory_space<vmem>>, %arg8: memref<18x18x8xf32, #tpu.memory_space<vmem>>) attributes {dimension_semantics = [#tpu.dimension_semantics<parallel>, #tpu.dimension_semantics<parallel>], iteration_bounds = array<i64: 2, 1>, scalar_prefetch = 0 : i64, scratch_operands = 1 : i64, tpu.core_type = #tpu.core_type<tc>, window_params = [{transform_indices = @transform_0, window_bounds = array<i64: 1, 16, 16, 8>}, {pipeline_mode = #tpu.pipeline_mode<synchronous>, transform_indices = @transform_1, window_bounds = array<i64: 3, 3, 8>}, {pipeline_mode = #tpu.pipeline_mode<synchronous>, transform_indices = @transform_2, window_bounds = array<i64: 1, 8>}, {pipeline_mode = #tpu.pipeline_mode<synchronous>, transform_indices = @transform_3, window_bounds = array<i64: 16, 8>}, {pipeline_mode = #tpu.pipeline_mode<synchronous>, transform_indices = @transform_4, window_bounds = array<i64: 16, 1>}, {transform_indices = @transform_5, window_bounds = array<i64: 1, 16, 256>}]} {
    %c16_i32 = arith.constant 16 : i32
    %0 = arith.muli %arg1, %c16_i32 : i32
    %1 = tpu.assume_multiple %0, 16 : i32
    %cst = arith.constant 0.000000e+00 : f32
    %2 = vector.broadcast %cst : f32 to vector<18x1x8xf32>
    %c0 = arith.constant 0 : index
    %c0_0 = arith.constant 0 : index
    %c0_1 = arith.constant 0 : index
    %3 = vector.load %arg8[%c0, %c0_0, %c0_1] : memref<18x18x8xf32, #tpu.memory_space<vmem>>, vector<18x1x8xf32>
    tpu.vector_store %arg8[%c0, %c0_0, %c0_1], %2 {strides = array<i32>} : memref<18x18x8xf32, #tpu.memory_space<vmem>>, vector<18x1x8xf32>,
    %c0_2 = arith.constant 0 : index
    %c17 = arith.constant 17 : index
    %c0_3 = arith.constant 0 : index
    %4 = vector.load %arg8[%c0_2, %c17, %c0_3] : memref<18x18x8xf32, #tpu.memory_space<vmem>>, vector<18x1x8xf32>
    tpu.vector_store %arg8[%c0_2, %c17, %c0_3], %2 {strides = array<i32>} : memref<18x18x8xf32, #tpu.memory_space<vmem>>, vector<18x1x8xf32>,
    %c1_i32 = arith.constant 1 : i32
    %5 = arith.subi %1, %c1_i32 : i32
    %c0_i32 = arith.constant 0 : i32
    %6 = arith.maxsi %5, %c0_i32 : i32
    %c16_i32_4 = arith.constant 16 : i32
    %7 = arith.addi %1, %c16_i32_4 : i32
    %c15_i32 = arith.constant 15 : i32
    %8 = arith.minsi %7, %c15_i32 : i32
    %c0_i32_5 = arith.constant 0 : i32
    %9 = arith.cmpi sgt, %arg1, %c0_i32_5 : i32
    %10 = arith.extui %9 : i1 to i32
    %11 = arith.sitofp %10 : i32 to f32
    %c1_i32_6 = arith.constant 1 : i32
    %12 = arith.addi %arg1, %c1_i32_6 : i32
    %c1_i32_7 = arith.constant 1 : i32
    %13 = arith.cmpi slt, %12, %c1_i32_7 : i32
    %14 = arith.extui %13 : i1 to i32
    %15 = arith.sitofp %14 : i32 to f32
    %c0_8 = arith.constant 0 : index
    %16 = arith.index_cast %6 : i32 to index
    %c0_9 = arith.constant 0 : index
    %c0_10 = arith.constant 0 : index
    %17 = vector.load %arg2[%c0_8, %16, %c0_9, %c0_10] : memref<1x16x16x8xf32, #tpu.memory_space<vmem>>, vector<1x1x16x8xf32>
    %18 = vector.shape_cast %17 : vector<1x1x16x8xf32> to vector<1x16x8xf32>
    %c0_11 = arith.constant 0 : index
    %19 = arith.index_cast %8 : i32 to index
    %c0_12 = arith.constant 0 : index
    %c0_13 = arith.constant 0 : index
    %20 = vector.load %arg2[%c0_11, %19, %c0_12, %c0_13] : memref<1x16x16x8xf32, #tpu.memory_space<vmem>>, vector<1x1x16x8xf32>
    %21 = vector.shape_cast %20 : vector<1x1x16x8xf32> to vector<1x16x8xf32>
    %22 = vector.broadcast %11 : f32 to vector<1x16x8xf32>
    %23 = arith.mulf %18, %22 : vector<1x16x8xf32>
    %c0_14 = arith.constant 0 : index
    %c1 = arith.constant 1 : index
    %c0_15 = arith.constant 0 : index
    %24 = vector.load %arg8[%c0_14, %c1, %c0_15] : memref<18x18x8xf32, #tpu.memory_space<vmem>>, vector<1x16x8xf32>
    tpu.vector_store %arg8[%c0_14, %c1, %c0_15], %23 {strides = array<i32>} : memref<18x18x8xf32, #tpu.memory_space<vmem>>, vector<1x16x8xf32>,
    %25 = vector.broadcast %15 : f32 to vector<1x16x8xf32>
    %26 = arith.mulf %21, %25 : vector<1x16x8xf32>
    %c17_16 = arith.constant 17 : index
    %c1_17 = arith.constant 1 : index
    %c0_18 = arith.constant 0 : index
    %27 = vector.load %arg8[%c17_16, %c1_17, %c0_18] : memref<18x18x8xf32, #tpu.memory_space<vmem>>, vector<1x16x8xf32>
    tpu.vector_store %arg8[%c17_16, %c1_17, %c0_18], %26 {strides = array<i32>} : memref<18x18x8xf32, #tpu.memory_space<vmem>>, vector<1x16x8xf32>,
    %c0_19 = arith.constant 0 : index
    %28 = arith.index_cast %1 : i32 to index
    %c0_20 = arith.constant 0 : index
    %c0_21 = arith.constant 0 : index
    %29 = vector.load %arg2[%c0_19, %28, %c0_20, %c0_21] : memref<1x16x16x8xf32, #tpu.memory_space<vmem>>, vector<1x16x16x8xf32>
    %30 = vector.shape_cast %29 : vector<1x16x16x8xf32> to vector<16x16x8xf32>
    %c1_22 = arith.constant 1 : index
    %c1_23 = arith.constant 1 : index
    %c0_24 = arith.constant 0 : index
    %31 = vector.load %arg8[%c1_22, %c1_23, %c0_24] : memref<18x18x8xf32, #tpu.memory_space<vmem>>, vector<16x16x8xf32>
    tpu.vector_store %arg8[%c1_22, %c1_23, %c0_24], %30 {strides = array<i32>} : memref<18x18x8xf32, #tpu.memory_space<vmem>>, vector<16x16x8xf32>,
    %c0_25 = arith.constant 0 : index
    %c0_26 = arith.constant 0 : index
    %c0_27 = arith.constant 0 : index
    %32 = vector.load %arg3[%c0_25, %c0_26, %c0_27] : memref<3x3x8xf32, #tpu.memory_space<vmem>>, vector<3x3x8xf32>
    %c0_28 = arith.constant 0 : index
    %c0_29 = arith.constant 0 : index
    %33 = vector.load %arg4[%c0_28, %c0_29] : memref<1x8xf32, #tpu.memory_space<vmem>>, vector<1x8xf32>
    %c0_30 = arith.constant 0 : index
    %c0_31 = arith.constant 0 : index
    %c0_32 = arith.constant 0 : index
    %34 = vector.load %arg8[%c0_30, %c0_31, %c0_32] : memref<18x18x8xf32, #tpu.memory_space<vmem>>, vector<16x16x8xf32>
    %35 = vector.extract_strided_slice %32 {offsets = [0, 0, 0], sizes = [1, 1, 8], strides = [1, 1, 1]} : vector<3x3x8xf32> to vector<1x1x8xf32>
    %36 = vector.shape_cast %35 : vector<1x1x8xf32> to vector<8xf32>
    %37 = vector.shape_cast %36 : vector<8xf32> to vector<1x1x8xf32>
    %38 = vector.broadcast %37 : vector<1x1x8xf32> to vector<16x16x8xf32>
    %39 = arith.mulf %34, %38 : vector<16x16x8xf32>
    %c0_33 = arith.constant 0 : index
    %c1_34 = arith.constant 1 : index
    %c0_35 = arith.constant 0 : index
    %40 = vector.load %arg8[%c0_33, %c1_34, %c0_35] : memref<18x18x8xf32, #tpu.memory_space<vmem>>, vector<16x16x8xf32>
    %41 = vector.extract_strided_slice %32 {offsets = [0, 1, 0], sizes = [1, 1, 8], strides = [1, 1, 1]} : vector<3x3x8xf32> to vector<1x1x8xf32>
    %42 = vector.shape_cast %41 : vector<1x1x8xf32> to vector<8xf32>
    %43 = vector.shape_cast %42 : vector<8xf32> to vector<1x1x8xf32>
    %44 = vector.broadcast %43 : vector<1x1x8xf32> to vector<16x16x8xf32>
    %45 = arith.mulf %40, %44 : vector<16x16x8xf32>
    %46 = arith.addf %39, %45 : vector<16x16x8xf32>
    %c0_36 = arith.constant 0 : index
    %c2 = arith.constant 2 : index
    %c0_37 = arith.constant 0 : index
    %47 = vector.load %arg8[%c0_36, %c2, %c0_37] : memref<18x18x8xf32, #tpu.memory_space<vmem>>, vector<16x16x8xf32>
    %48 = vector.extract_strided_slice %32 {offsets = [0, 2, 0], sizes = [1, 1, 8], strides = [1, 1, 1]} : vector<3x3x8xf32> to vector<1x1x8xf32>
    %49 = vector.shape_cast %48 : vector<1x1x8xf32> to vector<8xf32>
    %50 = vector.shape_cast %49 : vector<8xf32> to vector<1x1x8xf32>
    %51 = vector.broadcast %50 : vector<1x1x8xf32> to vector<16x16x8xf32>
    %52 = arith.mulf %47, %51 : vector<16x16x8xf32>
    %53 = arith.addf %46, %52 : vector<16x16x8xf32>
    %c1_38 = arith.constant 1 : index
    %c0_39 = arith.constant 0 : index
    %c0_40 = arith.constant 0 : index
    %54 = vector.load %arg8[%c1_38, %c0_39, %c0_40] : memref<18x18x8xf32, #tpu.memory_space<vmem>>, vector<16x16x8xf32>
    %55 = vector.extract_strided_slice %32 {offsets = [1, 0, 0], sizes = [1, 1, 8], strides = [1, 1, 1]} : vector<3x3x8xf32> to vector<1x1x8xf32>
    %56 = vector.shape_cast %55 : vector<1x1x8xf32> to vector<8xf32>
    %57 = vector.shape_cast %56 : vector<8xf32> to vector<1x1x8xf32>
    %58 = vector.broadcast %57 : vector<1x1x8xf32> to vector<16x16x8xf32>
    %59 = arith.mulf %54, %58 : vector<16x16x8xf32>
    %60 = arith.addf %53, %59 : vector<16x16x8xf32>
    %c1_41 = arith.constant 1 : index
    %c1_42 = arith.constant 1 : index
    %c0_43 = arith.constant 0 : index
    %61 = vector.load %arg8[%c1_41, %c1_42, %c0_43] : memref<18x18x8xf32, #tpu.memory_space<vmem>>, vector<16x16x8xf32>
    %62 = vector.extract_strided_slice %32 {offsets = [1, 1, 0], sizes = [1, 1, 8], strides = [1, 1, 1]} : vector<3x3x8xf32> to vector<1x1x8xf32>
    %63 = vector.shape_cast %62 : vector<1x1x8xf32> to vector<8xf32>
    %64 = vector.shape_cast %63 : vector<8xf32> to vector<1x1x8xf32>
    %65 = vector.broadcast %64 : vector<1x1x8xf32> to vector<16x16x8xf32>
    %66 = arith.mulf %61, %65 : vector<16x16x8xf32>
    %67 = arith.addf %60, %66 : vector<16x16x8xf32>
    %c1_44 = arith.constant 1 : index
    %c2_45 = arith.constant 2 : index
    %c0_46 = arith.constant 0 : index
    %68 = vector.load %arg8[%c1_44, %c2_45, %c0_46] : memref<18x18x8xf32, #tpu.memory_space<vmem>>, vector<16x16x8xf32>
    %69 = vector.extract_strided_slice %32 {offsets = [1, 2, 0], sizes = [1, 1, 8], strides = [1, 1, 1]} : vector<3x3x8xf32> to vector<1x1x8xf32>
    %70 = vector.shape_cast %69 : vector<1x1x8xf32> to vector<8xf32>
    %71 = vector.shape_cast %70 : vector<8xf32> to vector<1x1x8xf32>
    %72 = vector.broadcast %71 : vector<1x1x8xf32> to vector<16x16x8xf32>
    %73 = arith.mulf %68, %72 : vector<16x16x8xf32>
    %74 = arith.addf %67, %73 : vector<16x16x8xf32>
    %c2_47 = arith.constant 2 : index
    %c0_48 = arith.constant 0 : index
    %c0_49 = arith.constant 0 : index
    %75 = vector.load %arg8[%c2_47, %c0_48, %c0_49] : memref<18x18x8xf32, #tpu.memory_space<vmem>>, vector<16x16x8xf32>
    %76 = vector.extract_strided_slice %32 {offsets = [2, 0, 0], sizes = [1, 1, 8], strides = [1, 1, 1]} : vector<3x3x8xf32> to vector<1x1x8xf32>
    %77 = vector.shape_cast %76 : vector<1x1x8xf32> to vector<8xf32>
    %78 = vector.shape_cast %77 : vector<8xf32> to vector<1x1x8xf32>
    %79 = vector.broadcast %78 : vector<1x1x8xf32> to vector<16x16x8xf32>
    %80 = arith.mulf %75, %79 : vector<16x16x8xf32>
    %81 = arith.addf %74, %80 : vector<16x16x8xf32>
    %c2_50 = arith.constant 2 : index
    %c1_51 = arith.constant 1 : index
    %c0_52 = arith.constant 0 : index
    %82 = vector.load %arg8[%c2_50, %c1_51, %c0_52] : memref<18x18x8xf32, #tpu.memory_space<vmem>>, vector<16x16x8xf32>
    %83 = vector.extract_strided_slice %32 {offsets = [2, 1, 0], sizes = [1, 1, 8], strides = [1, 1, 1]} : vector<3x3x8xf32> to vector<1x1x8xf32>
    %84 = vector.shape_cast %83 : vector<1x1x8xf32> to vector<8xf32>
    %85 = vector.shape_cast %84 : vector<8xf32> to vector<1x1x8xf32>
    %86 = vector.broadcast %85 : vector<1x1x8xf32> to vector<16x16x8xf32>
    %87 = arith.mulf %82, %86 : vector<16x16x8xf32>
    %88 = arith.addf %81, %87 : vector<16x16x8xf32>
    %c2_53 = arith.constant 2 : index
    %c2_54 = arith.constant 2 : index
    %c0_55 = arith.constant 0 : index
    %89 = vector.load %arg8[%c2_53, %c2_54, %c0_55] : memref<18x18x8xf32, #tpu.memory_space<vmem>>, vector<16x16x8xf32>
    %90 = vector.extract_strided_slice %32 {offsets = [2, 2, 0], sizes = [1, 1, 8], strides = [1, 1, 1]} : vector<3x3x8xf32> to vector<1x1x8xf32>
    %91 = vector.shape_cast %90 : vector<1x1x8xf32> to vector<8xf32>
    %92 = vector.shape_cast %91 : vector<8xf32> to vector<1x1x8xf32>
    %93 = vector.broadcast %92 : vector<1x1x8xf32> to vector<16x16x8xf32>
    %94 = arith.mulf %89, %93 : vector<16x16x8xf32>
    %95 = arith.addf %88, %94 : vector<16x16x8xf32>
    %96 = vector.shape_cast %33 : vector<1x8xf32> to vector<1x1x8xf32>
    %97 = vector.broadcast %96 : vector<1x1x8xf32> to vector<16x16x8xf32>
    %98 = arith.addf %95, %97 : vector<16x16x8xf32>
    %cst_56 = arith.constant 0.000000e+00 : f32
    %cst_57 = arith.constant 6.000000e+00 : f32
    %99 = vector.broadcast %cst_56 : f32 to vector<16x16x8xf32>
    %100 = arith.maximumf %99, %98 : vector<16x16x8xf32>
    %101 = vector.broadcast %cst_57 : f32 to vector<16x16x8xf32>
    %102 = arith.minimumf %101, %100 : vector<16x16x8xf32>
    %103 = vector.shape_cast %102 : vector<16x16x8xf32> to vector<256x8xf32>
    %c0_58 = arith.constant 0 : index
    %c0_59 = arith.constant 0 : index
    %104 = vector.load %arg5[%c0_58, %c0_59] : memref<16x8xf32, #tpu.memory_space<vmem>>, vector<16x8xf32>
    %cst_60 = arith.constant dense<0.000000e+00> : vector<16x256xf32>
    %105 = tpu.matmul %104, %103, %cst_60 {dimension_numbers = #tpu.dot_dimension_numbers<[1], [1], [0], [0], [0, 0, 1, 0], [], []>} : vector<16x8xf32>, vector<256x8xf32>, vector<16x256xf32> -> vector<16x256xf32>
    %c0_61 = arith.constant 0 : index
    %c0_62 = arith.constant 0 : index
    %106 = vector.load %arg6[%c0_61, %c0_62] : memref<16x1xf32, #tpu.memory_space<vmem>>, vector<16x1xf32>
    %107 = vector.broadcast %106 : vector<16x1xf32> to vector<16x256xf32>
    %108 = arith.addf %105, %107 : vector<16x256xf32>
    %cst_63 = arith.constant 0.000000e+00 : f32
    %cst_64 = arith.constant 6.000000e+00 : f32
    %109 = vector.broadcast %cst_63 : f32 to vector<16x256xf32>
    %110 = arith.maximumf %109, %108 : vector<16x256xf32>
    %111 = vector.broadcast %cst_64 : f32 to vector<16x256xf32>
    %112 = arith.minimumf %111, %110 : vector<16x256xf32>
    %c0_65 = arith.constant 0 : index
    %c0_66 = arith.constant 0 : index
    %c0_67 = arith.constant 0 : index
    %113 = vector.load %arg7[%c0_65, %c0_66, %c0_67] : memref<1x16x256xf32, #tpu.memory_space<vmem>>, vector<1x16x256xf32>
    %114 = vector.shape_cast %113 : vector<1x16x256xf32> to vector<16x256xf32>
    %115 = vector.shape_cast %112 : vector<16x256xf32> to vector<1x16x256xf32>
    tpu.vector_store %arg7[%c0_65, %c0_66, %c0_67], %115 {strides = array<i32>} : memref<1x16x256xf32, #tpu.memory_space<vmem>>, vector<1x16x256xf32>,
    return
  }
  func.func @transform_0(%arg0: i32, %arg1: i32) -> (i32, i32, i32, i32) {
    %c0_i32 = arith.constant 0 : i32
    %c0_i32_0 = arith.constant 0 : i32
    %c0_i32_1 = arith.constant 0 : i32
    %c0_i32_2 = arith.constant 0 : i32
    return %arg0, %c0_i32, %c0_i32_0, %c0_i32_1 : i32, i32, i32, i32
  }
  func.func @transform_1(%arg0: i32, %arg1: i32) -> (i32, i32, i32) {
    %c0_i32 = arith.constant 0 : i32
    %c0_i32_0 = arith.constant 0 : i32
    %c0_i32_1 = arith.constant 0 : i32
    %c0_i32_2 = arith.constant 0 : i32
    return %c0_i32, %c0_i32_0, %c0_i32_1 : i32, i32, i32
  }
  func.func @transform_2(%arg0: i32, %arg1: i32) -> (i32, i32) {
    %c0_i32 = arith.constant 0 : i32
    %c0_i32_0 = arith.constant 0 : i32
    %c0_i32_1 = arith.constant 0 : i32
    return %c0_i32, %c0_i32_0 : i32, i32
  }
  func.func @transform_3(%arg0: i32, %arg1: i32) -> (i32, i32) {
    %c0_i32 = arith.constant 0 : i32
    %c0_i32_0 = arith.constant 0 : i32
    %c0_i32_1 = arith.constant 0 : i32
    return %c0_i32, %c0_i32_0 : i32, i32
  }
  func.func @transform_4(%arg0: i32, %arg1: i32) -> (i32, i32) {
    %c0_i32 = arith.constant 0 : i32
    %c0_i32_0 = arith.constant 0 : i32
    %c0_i32_1 = arith.constant 0 : i32
    return %c0_i32, %c0_i32_0 : i32, i32
  }
  func.func @transform_5(%arg0: i32, %arg1: i32) -> (i32, i32, i32) {
    %c0_i32 = arith.constant 0 : i32
    %c0_i32_0 = arith.constant 0 : i32
    return %arg0, %c0_i32, %arg1 : i32, i32, i32
  }
}

</mosaic_0001>

<llo_original>
// kernel: tpu_custom_call.1
$region0: #{tpu_custom_call.1}
  #allocation0 [shape = 'u32[]', space=smem, size = 0x4, offset = 0x4, fixed_abs, tag = 'smem constant byte address 0x4 - core index']
  #allocation1 [shape = 'u32[144,128]{1,0:T(1,128)}', space=vmem, size = 0x12000, scoped, tag = 'internal scratch']
  #allocation2 [shape = 'f32[18,18,8]{2,1,0:T(8,128)}', space=vmem, size = 0x36000, scoped, tag = 'scratch operand']
  %s0 = inlined_call_operand.vmem [shape: f32[2,16,16,8], index: 0, kind: input, shape index: {}]
  %s1 = inlined_call_operand.vmem [shape: f32[3,3,8], index: 1, kind: input, shape index: {}]
  %s2 = inlined_call_operand.vmem [shape: f32[1,8], index: 2, kind: input, shape index: {}]
  %s3 = inlined_call_operand.vmem [shape: f32[16,8], index: 3, kind: input, shape index: {}]
  %s4 = inlined_call_operand.vmem [shape: f32[16,1], index: 4, kind: input, shape index: {}]
  %s5 = inlined_call_operand.hbm [shape: f32[2,16,256], index: 5, kind: output, shape index: {}]
  %s6 = sld [smem:[#allocation0]]
  $region53: #{tpu_custom_call.1} parent=0
    _
  %s8 = ssub.s32 1, %s6
  %s9 = scalar_select 0, %s8, %s6
  $region1: #{tpu_custom_call.1} parent=0
    #allocation3 [shape = 'u8[32768]{0}', space=vmem, size = 0x8000, scoped, tag = 'output window, operand 0']
    #allocation4 [shape = 's32[2]{0}', space=sflag, size = 0x8, scoped, tag = 'scoped memory for tpu_custom_call.1']
    %10 = vsyncpa [#allocation4], 0
    %s11 = scalar_lea.sflag [#allocation4], 1
    %12 = vsyncpa %s11, 0
    loop: start=0, step=1, limit=4
    $region2: #{tpu_custom_call.1} parent=1 // loop_pre_header
      _
    $region3: #{tpu_custom_call.1} parent=1 // loop_header
      %s14 = sphi 0, %s18
      %p15 = scmp.ge.s32.totalorder %s14, 4
      %s21 = sphi 0, %s33
      %s22 = sphi 0, %s29
      %s23 = sphi 0, %s21
      %s24 = sphi 0, %s22
      %s25 = sphi 0, %s23
      %s26 = sphi 0, %s24
      %s36 = sphi 0, %s38
      %s39 = sphi 0, %s36
      %s40 = sphi 0, %s39
      %s56 = sphi 0, %s40
      %s60 = sphi 0, %s60
      %s62 = sphi 0, %s60
      %s63 = sphi 0, %s62
      %s77 = sphi 0, %s63
      %s81 = sphi 0, %s81
      %s83 = sphi 0, %s81
      %s84 = sphi 0, %s83
      %s98 = sphi 0, %s84
      %s102 = sphi 0, %s102
      %s104 = sphi 0, %s102
      %s105 = sphi 0, %s104
      %s119 = sphi 0, %s105
      %s123 = sphi 0, %s123
      %s125 = sphi 0, %s123
      %s126 = sphi 0, %s125
      %s140 = sphi 0, %s126
      %s148 = sphi 0, %s150
      %s151 = sphi 0, %s148
      %s152 = sphi 0, %s151
      %s168 = sphi 0, %s152
    $region4: #{tpu_custom_call.1} parent=1 // loop_header_branch
      %17 = sbr.rel (%p15) target = $region8
    $region5: #{tpu_custom_call.1} parent=1 // loop_body
      %s19 = ssub.s32 %s14, 1
      %s20 = ssub.s32 %s14, 2
      %s27 = sadd.s32 1, %s22
      %p28 = scmp.ge.s32.totalorder %s27, 1
      %s29 = scalar_select %p28, 0, %s27
      %s30 = sadd.s32 1, %s21
      %s31 = scalar_select %p28, %s30, %s21
      %p32 = scmp.ge.s32.totalorder %s31, 2
      %s33 = scalar_select %p32, 0, %s31
      %s34 = ssub.s32 %s21, %s33
      %p35 = scmp.eq.s32.totalorder %s34, 0
      %s37 = sadd.s32 %s36, 1
      %s38 = scalar_select %p35, %s36, %s37
      %p41 = pneg %p35
      %p42 = scmp.eq.s32.totalorder %s14, 1
      %p43 = por %p41, %p42
      %p44 = scmp.ne.s32.totalorder %s36, %s39
      %p45 = scmp.eq.s32.totalorder %s14, 0
      %p46 = por %p44, %p45
      %p47 = scmp.ne.s32.totalorder %s36, %s39
      %p48 = scmp.eq.s32.totalorder %s19, 1
      %p49 = por %p47, %p48
      %p50 = scmp.ne.s32.totalorder %s39, %s40
      %p51 = scmp.eq.s32.totalorder %s19, 0
      %p52 = por %p50, %p51
      %p53 = scmp.ne.s32.totalorder %s39, %s40
      %p54 = scmp.eq.s32.totalorder %s20, 1
      %p55 = por %p53, %p54
      %p57 = scmp.ne.s32.totalorder %s40, %s56
      %p58 = scmp.eq.s32.totalorder %s20, 0
      %p59 = por %p57, %p58
      %s61 = sadd.s32 %s60, 1
      %p64 = scmp.eq.s32.totalorder %s14, 1
      %p65 = scmp.ne.s32.totalorder %s60, %s62
      %p66 = scmp.eq.s32.totalorder %s14, 0
      %p67 = por %p65, %p66
      %p68 = scmp.ne.s32.totalorder %s60, %s62
      %p69 = scmp.eq.s32.totalorder %s19, 1
      %p70 = por %p68, %p69
      %p71 = scmp.ne.s32.totalorder %s62, %s63
      %p72 = scmp.eq.s32.totalorder %s19, 0
      %p73 = por %p71, %p72
      %p74 = scmp.ne.s32.totalorder %s62, %s63
      %p75 = scmp.eq.s32.totalorder %s20, 1
      %p76 = por %p74, %p75
      %p78 = scmp.ne.s32.totalorder %s63, %s77
      %p79 = scmp.eq.s32.totalorder %s20, 0
      %p80 = por %p78, %p79
      %s82 = sadd.s32 %s81, 1
      %p85 = scmp.eq.s32.totalorder %s14, 1
      %p86 = scmp.ne.s32.totalorder %s81, %s83
      %p87 = scmp.eq.s32.totalorder %s14, 0
      %p88 = por %p86, %p87
      %p89 = scmp.ne.s32.totalorder %s81, %s83
      %p90 = scmp.eq.s32.totalorder %s19, 1
      %p91 = por %p89, %p90
      %p92 = scmp.ne.s32.totalorder %s83, %s84
      %p93 = scmp.eq.s32.totalorder %s19, 0
      %p94 = por %p92, %p93
      %p95 = scmp.ne.s32.totalorder %s83, %s84
      %p96 = scmp.eq.s32.totalorder %s20, 1
      %p97 = por %p95, %p96
      %p99 = scmp.ne.s32.totalorder %s84, %s98
      %p100 = scmp.eq.s32.totalorder %s20, 0
      %p101 = por %p99, %p100
      %s103 = sadd.s32 %s102, 1
      %p106 = scmp.eq.s32.totalorder %s14, 1
      %p107 = scmp.ne.s32.totalorder %s102, %s104
      %p108 = scmp.eq.s32.totalorder %s14, 0
      %p109 = por %p107, %p108
      %p110 = scmp.ne.s32.totalorder %s102, %s104
      %p111 = scmp.eq.s32.totalorder %s19, 1
      %p112 = por %p110, %p111
      %p113 = scmp.ne.s32.totalorder %s104, %s105
      %p114 = scmp.eq.s32.totalorder %s19, 0
      %p115 = por %p113, %p114
      %p116 = scmp.ne.s32.totalorder %s104, %s105
      %p117 = scmp.eq.s32.totalorder %s20, 1
      %p118 = por %p116, %p117
      %p120 = scmp.ne.s32.totalorder %s105, %s119
      %p121 = scmp.eq.s32.totalorder %s20, 0
      %p122 = por %p120, %p121
      %s124 = sadd.s32 %s123, 1
      %p127 = scmp.eq.s32.totalorder %s14, 1
      %p128 = scmp.ne.s32.totalorder %s123, %s125
      %p129 = scmp.eq.s32.totalorder %s14, 0
      %p130 = por %p128, %p129
      %p131 = scmp.ne.s32.totalorder %s123, %s125
      %p132 = scmp.eq.s32.totalorder %s19, 1
      %p133 = por %p131, %p132
      %p134 = scmp.ne.s32.totalorder %s125, %s126
      %p135 = scmp.eq.s32.totalorder %s19, 0
      %p136 = por %p134, %p135
      %p137 = scmp.ne.s32.totalorder %s125, %s126
      %p138 = scmp.eq.s32.totalorder %s20, 1
      %p139 = por %p137, %p138
      %p141 = scmp.ne.s32.totalorder %s126, %s140
      %p142 = scmp.eq.s32.totalorder %s20, 0
      %p143 = por %p141, %p142
      %s144 = ssub.s32 %s21, %s33
      %s145 = ssub.s32 %s22, %s29
      %s146 = sor.u32 %s144, %s145
      %p147 = scmp.eq.s32.totalorder %s146, 0
      %s149 = sadd.s32 %s148, 1
      %s150 = scalar_select %p147, %s148, %s149
      %p153 = pneg %p147
      %p154 = scmp.eq.s32.totalorder %s14, 1
      %p155 = por %p153, %p154
      %p156 = scmp.ne.s32.totalorder %s148, %s151
      %p157 = scmp.eq.s32.totalorder %s14, 0
      %p158 = por %p156, %p157
      %p159 = scmp.ne.s32.totalorder %s148, %s151
      %p160 = scmp.eq.s32.totalorder %s19, 1
      %p161 = por %p159, %p160
      %p162 = scmp.ne.s32.totalorder %s151, %s152
      %p163 = scmp.eq.s32.totalorder %s19, 0
      %p164 = por %p162, %p163
      %p165 = scmp.ne.s32.totalorder %s151, %s152
      %p166 = scmp.eq.s32.totalorder %s20, 1
      %p167 = por %p165, %p166
      %p169 = scmp.ne.s32.totalorder %s152, %s168
      %p170 = scmp.eq.s32.totalorder %s20, 0
      %p171 = por %p169, %p170
      %p172 = scmp.le.s32.totalorder 1, %s14
      %p173 = scmp.lt.s32.totalorder %s14, 3
      %p174 = pnand %p172, %p173
      %p175 = pneg %p174
      // Predicated region
      $region9: #{tpu_custom_call.1} parent=5 // pred_check
        _
      $region10: #{tpu_custom_call.1} parent=5 // pred_check_branch
        %177 = sbr.rel (%p174) target = $region12
      $region11: #{tpu_custom_call.1} parent=5 // pred_region
        %s178 = ssub.s32 %s14, 1
        // Predicated region
        $region13: #{tpu_custom_call.1} parent=11 // pred_check
          %p179 = pneg %p73
        $region14: #{tpu_custom_call.1} parent=11 // pred_check_branch
          %181 = sbr.rel (%p179) target = $region16
        $region15: #{tpu_custom_call.1} parent=11 // pred_region
          _
        $region16: #{tpu_custom_call.1} parent=11 // pred_fallthru
          _
        // Predicated region
        $region17: #{tpu_custom_call.1} parent=11 // pred_check
          %p182 = pneg %p94
        $region18: #{tpu_custom_call.1} parent=11 // pred_check_branch
          %184 = sbr.rel (%p182) target = $region20
        $region19: #{tpu_custom_call.1} parent=11 // pred_region
          _
        $region20: #{tpu_custom_call.1} parent=11 // pred_fallthru
          _
        // Predicated region
        $region21: #{tpu_custom_call.1} parent=11 // pred_check
          %p185 = pneg %p115
        $region22: #{tpu_custom_call.1} parent=11 // pred_check_branch
          %187 = sbr.rel (%p185) target = $region24
        $region23: #{tpu_custom_call.1} parent=11 // pred_region
          _
        $region24: #{tpu_custom_call.1} parent=11 // pred_fallthru
          _
        // Predicated region
        $region25: #{tpu_custom_call.1} parent=11 // pred_check
          %p188 = pneg %p136
        $region26: #{tpu_custom_call.1} parent=11 // pred_check_branch
          %190 = sbr.rel (%p188) target = $region28
        $region27: #{tpu_custom_call.1} parent=11 // pred_region
          _
        $region28: #{tpu_custom_call.1} parent=11 // pred_fallthru
          _
      $region12: #{tpu_custom_call.1} parent=5 // pred_fallthru
        _
      %p191 = scmp.lt.s32.totalorder %s14, 2
      // Predicated region
      $region29: #{tpu_custom_call.1} parent=5 // pred_check
        %p192 = pneg %p191
      $region30: #{tpu_custom_call.1} parent=5 // pred_check_branch
        %194 = sbr.rel (%p192) target = $region32
      $region31: #{tpu_custom_call.1} parent=5 // pred_region
        // Predicated region
        $region33: #{tpu_custom_call.1} parent=31 // pred_check
          %p195 = pneg %p46
        $region34: #{tpu_custom_call.1} parent=31 // pred_check_branch
          %197 = sbr.rel (%p195) target = $region36
        $region35: #{tpu_custom_call.1} parent=31 // pred_region
          %p198 = scmp.lt.s32.totalorder %s21, 1
          %s199 = scalar_select %p198, %s21, 1
          %s200 = smul.addr %s199, 32
          %s201 = smul.addr %s200, 8
          %s202 = scalar_lea.vmem %s0, %s201
        $region36: #{tpu_custom_call.1} parent=31 // pred_fallthru
          _
      $region32: #{tpu_custom_call.1} parent=5 // pred_fallthru
        _
      %p203 = scmp.le.s32.totalorder 1, %s14
      %p204 = scmp.lt.s32.totalorder %s14, 3
      %p205 = pnand %p203, %p204
      %p206 = pneg %p205
      // Predicated region
      $region37: #{tpu_custom_call.1} parent=5 // pred_check
        _
      $region38: #{tpu_custom_call.1} parent=5 // pred_check_branch
        %208 = sbr.rel (%p205) target = $region40
      $region39: #{tpu_custom_call.1} parent=5 // pred_region
        %s209 = ssub.s32 %s14, 1
        %p210 = scmp.lt.s32.totalorder %s23, 1
        %s211 = scalar_select %p210, %s23, 1
        %s212 = smul.addr %s211, 32
        %s213 = smul.addr %s212, 8
        %s214 = scalar_lea.vmem %s0, %s213
        %p215 = pneg %p52
        %p216 = pneg %p49
        %p217 = pneg %p73
        %p218 = pneg %p70
        %p219 = pneg %p94
        %p220 = pneg %p91
        %p221 = pneg %p115
        %p222 = pneg %p112
        %p223 = pneg %p136
        %p224 = pneg %p133
        %p225 = pneg %p164
        %p226 = pneg %p161
        %s227 = sand.u32 %s151, 1
        %s228 = scalar_lea.sflag [#allocation4], %s227
        %s229 = sand.u32 %s151, 1
        %s230 = smul.addr %s229, 32
        %s231 = scalar_lea.vmem [#allocation3], %s230
        %p232 = scmp.lt.s32.totalorder %s23, 1
        %s233 = scalar_select %p232, %s23, 1
        %s234 = smul.addr %s233, 32
        %s235 = smul.addr %s234, 8
        %s236 = scalar_lea.vmem %s0, %s235
        %s237 = smul.u32 2, %s24
        %s238 = smul.u32 %s24, 16
        %vm239 = vcmask 57344
        %240 = vst.msk [vmem:[#allocation2] sm:$0x1] %vm239, 0.0
        %241 = vst.msk [vmem:[#allocation2 + $0x18] sm:$0x1] %vm239, 0.0
        %242 = vst.msk [vmem:[#allocation2 + $0x30] sm:$0x1] %vm239, 0.0
        %243 = vst.msk [vmem:[#allocation2 + $0x48] sm:$0x1] %vm239, 0.0
        %244 = vst.msk [vmem:[#allocation2 + $0x60] sm:$0x1] %vm239, 0.0
        %245 = vst.msk [vmem:[#allocation2 + $0x78] sm:$0x1] %vm239, 0.0
        %246 = vst.msk [vmem:[#allocation2 + $0x90] sm:$0x1] %vm239, 0.0
        %247 = vst.msk [vmem:[#allocation2 + $0xa8] sm:$0x1] %vm239, 0.0
        %248 = vst.msk [vmem:[#allocation2 + $0xc0] sm:$0x1] %vm239, 0.0
        %249 = vst.msk [vmem:[#allocation2 + $0xd8] sm:$0x1] %vm239, 0.0
        %250 = vst.msk [vmem:[#allocation2 + $0xf0] sm:$0x1] %vm239, 0.0
        %251 = vst.msk [vmem:[#allocation2 + $0x108] sm:$0x1] %vm239, 0.0
        %252 = vst.msk [vmem:[#allocation2 + $0x120] sm:$0x1] %vm239, 0.0
        %253 = vst.msk [vmem:[#allocation2 + $0x138] sm:$0x1] %vm239, 0.0
        %254 = vst.msk [vmem:[#allocation2 + $0x150] sm:$0x1] %vm239, 0.0
        %255 = vst.msk [vmem:[#allocation2 + $0x168] sm:$0x1] %vm239, 0.0
        %256 = vst.msk [vmem:[#allocation2 + $0x180] sm:$0x1] %vm239, 0.0
        %257 = vst.msk [vmem:[#allocation2 + $0x198] sm:$0x1] %vm239, 0.0
        %258 = vst.msk [vmem:[#allocation2 + $0x11] sm:$0x1] %vm239, 0.0
        %259 = vst.msk [vmem:[#allocation2 + $0x29] sm:$0x1] %vm239, 0.0
        %260 = vst.msk [vmem:[#allocation2 + $0x41] sm:$0x1] %vm239, 0.0
        %261 = vst.msk [vmem:[#allocation2 + $0x59] sm:$0x1] %vm239, 0.0
        %262 = vst.msk [vmem:[#allocation2 + $0x71] sm:$0x1] %vm239, 0.0
        %263 = vst.msk [vmem:[#allocation2 + $0x89] sm:$0x1] %vm239, 0.0
        %264 = vst.msk [vmem:[#allocation2 + $0xa1] sm:$0x1] %vm239, 0.0
        %265 = vst.msk [vmem:[#allocation2 + $0xb9] sm:$0x1] %vm239, 0.0
        %266 = vst.msk [vmem:[#allocation2 + $0xd1] sm:$0x1] %vm239, 0.0
        %267 = vst.msk [vmem:[#allocation2 + $0xe9] sm:$0x1] %vm239, 0.0
        %268 = vst.msk [vmem:[#allocation2 + $0x101] sm:$0x1] %vm239, 0.0
        %269 = vst.msk [vmem:[#allocation2 + $0x119] sm:$0x1] %vm239, 0.0
        %270 = vst.msk [vmem:[#allocation2 + $0x131] sm:$0x1] %vm239, 0.0
        %271 = vst.msk [vmem:[#allocation2 + $0x149] sm:$0x1] %vm239, 0.0
        %272 = vst.msk [vmem:[#allocation2 + $0x161] sm:$0x1] %vm239, 0.0
        %273 = vst.msk [vmem:[#allocation2 + $0x179] sm:$0x1] %vm239, 0.0
        %274 = vst.msk [vmem:[#allocation2 + $0x191] sm:$0x1] %vm239, 0.0
        %275 = vst.msk [vmem:[#allocation2 + $0x1a9] sm:$0x1] %vm239, 0.0
        %s276 = ssub.s32 %s238, 1
        %p277 = scmp.gt.s32.totalorder %s276, 0
        %s278 = scalar_select %p277, %s276, 0
        %s279 = sadd.s32 %s238, 16
        %p280 = scmp.lt.s32.totalorder %s279, 15
        %s281 = scalar_select %p280, %s279, 15
        %p282 = scmp.gt.s32.totalorder %s24, 0
        %s283 = scalar_select %p282, 1, 0
        %s284 = scvt.s32.f32 %s283
        %s285 = sadd.s32 %s24, 1
        %p286 = scmp.lt.s32.totalorder %s285, 1
        %s287 = scalar_select %p286, 1, 0
        %s288 = scvt.s32.f32 %s287
        %s289 = smul.u32 %s278, 16
        %s290 = scalar_lea.vmem %s236, %s289
        %v291 = vld [vmem:[%s290] sm:$0xff]
        %v292 = vld [vmem:[%s290 + $0x8] sm:$0xff]
        %s293 = smul.u32 %s281, 16
        %s294 = scalar_lea.vmem %s236, %s293
        %v295 = vld [vmem:[%s294] sm:$0xff]
        %v296 = vld [vmem:[%s294 + $0x8] sm:$0xff]
        %v297 = vstv %s284
        %v298 = vmul.f32 %v291, %v297
        %v299 = vmul.f32 %v292, %v297
        %vm300 = vcmask 64512
        %301 = vst.msk [vmem:[#allocation2 + $0x1] sm:$0xff] %vm300, %v298
        %302 = vst.msk [vmem:[#allocation2 + $0x9] sm:$0xff] %vm300, %v299
        %v303 = vstv %s288
        %v304 = vmul.f32 %v295, %v303
        %v305 = vmul.f32 %v296, %v303
        %s306 = scalar_lea.vmem [#allocation2], 408
        %307 = vst.msk [vmem:[%s306 + $0x1] sm:$0xff] %vm300, %v304
        %308 = vst.msk [vmem:[%s306 + $0x9] sm:$0xff] %vm300, %v305
        %s309 = smul.u32 %s238, 16
        %s310 = scalar_lea.vmem %s236, %s309
        %v311 = vld [vmem:[%s310] sm:$0xff]
        %v312 = vld [vmem:[%s310 + $0x8] sm:$0xff]
        %v313 = vld [vmem:[%s310 + $0x10] sm:$0xff]
        %v314 = vld [vmem:[%s310 + $0x18] sm:$0xff]
        %v315 = vld [vmem:[%s310 + $0x20] sm:$0xff]
        %v316 = vld [vmem:[%s310 + $0x28] sm:$0xff]
        %v317 = vld [vmem:[%s310 + $0x30] sm:$0xff]
        %v318 = vld [vmem:[%s310 + $0x38] sm:$0xff]
        %v319 = vld [vmem:[%s310 + $0x40] sm:$0xff]
        %v320 = vld [vmem:[%s310 + $0x48] sm:$0xff]
        %v321 = vld [vmem:[%s310 + $0x50] sm:$0xff]
        %v322 = vld [vmem:[%s310 + $0x58] sm:$0xff]
        %v323 = vld [vmem:[%s310 + $0x60] sm:$0xff]
        %v324 = vld [vmem:[%s310 + $0x68] sm:$0xff]
        %v325 = vld [vmem:[%s310 + $0x70] sm:$0xff]
        %v326 = vld [vmem:[%s310 + $0x78] sm:$0xff]
        %v327 = vld [vmem:[%s310 + $0x80] sm:$0xff]
        %v328 = vld [vmem:[%s310 + $0x88] sm:$0xff]
        %v329 = vld [vmem:[%s310 + $0x90] sm:$0xff]
        %v330 = vld [vmem:[%s310 + $0x98] sm:$0xff]
        %v331 = vld [vmem:[%s310 + $0xa0] sm:$0xff]
        %v332 = vld [vmem:[%s310 + $0xa8] sm:$0xff]
        %v333 = vld [vmem:[%s310 + $0xb0] sm:$0xff]
        %v334 = vld [vmem:[%s310 + $0xb8] sm:$0xff]
        %v335 = vld [vmem:[%s310 + $0xc0] sm:$0xff]
        %v336 = vld [vmem:[%s310 + $0xc8] sm:$0xff]
        %v337 = vld [vmem:[%s310 + $0xd0] sm:$0xff]
        %v338 = vld [vmem:[%s310 + $0xd8] sm:$0xff]
        %v339 = vld [vmem:[%s310 + $0xe0] sm:$0xff]
        %v340 = vld [vmem:[%s310 + $0xe8] sm:$0xff]
        %v341 = vld [vmem:[%s310 + $0xf0] sm:$0xff]
        %v342 = vld [vmem:[%s310 + $0xf8] sm:$0xff]
        %s343 = scalar_lea.vmem [#allocation2], 24
        %344 = vst.msk [vmem:[%s343 + $0x1] sm:$0xff] %vm300, %v311
        %345 = vst.msk [vmem:[%s343 + $0x9] sm:$0xff] %vm300, %v312
        %346 = vst.msk [vmem:[%s343 + $0x19] sm:$0xff] %vm300, %v313
        %347 = vst.msk [vmem:[%s343 + $0x21] sm:$0xff] %vm300, %v314
        %348 = vst.msk [vmem:[%s343 + $0x31] sm:$0xff] %vm300, %v315
        %349 = vst.msk [vmem:[%s343 + $0x39] sm:$0xff] %vm300, %v316
        %350 = vst.msk [vmem:[%s343 + $0x49] sm:$0xff] %vm300, %v317
        %351 = vst.msk [vmem:[%s343 + $0x51] sm:$0xff] %vm300, %v318
        %352 = vst.msk [vmem:[%s343 + $0x61] sm:$0xff] %vm300, %v319
        %353 = vst.msk [vmem:[%s343 + $0x69] sm:$0xff] %vm300, %v320
        %354 = vst.msk [vmem:[%s343 + $0x79] sm:$0xff] %vm300, %v321
        %355 = vst.msk [vmem:[%s343 + $0x81] sm:$0xff] %vm300, %v322
        %356 = vst.msk [vmem:[%s343 + $0x91] sm:$0xff] %vm300, %v323
        %357 = vst.msk [vmem:[%s343 + $0x99] sm:$0xff] %vm300, %v324
        %358 = vst.msk [vmem:[%s343 + $0xa9] sm:$0xff] %vm300, %v325
        %359 = vst.msk [vmem:[%s343 + $0xb1] sm:$0xff] %vm300, %v326
        %360 = vst.msk [vmem:[%s343 + $0xc1] sm:$0xff] %vm300, %v327
        %361 = vst.msk [vmem:[%s343 + $0xc9] sm:$0xff] %vm300, %v328
        %362 = vst.msk [vmem:[%s343 + $0xd9] sm:$0xff] %vm300, %v329
        %363 = vst.msk [vmem:[%s343 + $0xe1] sm:$0xff] %vm300, %v330
        %364 = vst.msk [vmem:[%s343 + $0xf1] sm:$0xff] %vm300, %v331
        %365 = vst.msk [vmem:[%s343 + $0xf9] sm:$0xff] %vm300, %v332
        %366 = vst.msk [vmem:[%s343 + $0x109] sm:$0xff] %vm300, %v333
        %367 = vst.msk [vmem:[%s343 + $0x111] sm:$0xff] %vm300, %v334
        %368 = vst.msk [vmem:[%s343 + $0x121] sm:$0xff] %vm300, %v335
        %369 = vst.msk [vmem:[%s343 + $0x129] sm:$0xff] %vm300, %v336
        %370 = vst.msk [vmem:[%s343 + $0x139] sm:$0xff] %vm300, %v337
        %371 = vst.msk [vmem:[%s343 + $0x141] sm:$0xff] %vm300, %v338
        %372 = vst.msk [vmem:[%s343 + $0x151] sm:$0xff] %vm300, %v339
        %373 = vst.msk [vmem:[%s343 + $0x159] sm:$0xff] %vm300, %v340
        %374 = vst.msk [vmem:[%s343 + $0x169] sm:$0xff] %vm300, %v341
        %375 = vst.msk [vmem:[%s343 + $0x171] sm:$0xff] %vm300, %v342
        %v376 = vld [vmem:[%s1] sm:$0x7]
        %v377 = vld [vmem:[%s1 + $0x4] sm:$0x7]
        %v378 = vld [vmem:[%s1 + $0x8] sm:$0x7]
        %v379 = vld [vmem:[%s2] sm:$0x1]
        %v380 = vld [vmem:[#allocation2] sm:$0xff]
        %v381 = vld [vmem:[#allocation2 + $0x8] sm:$0xff]
        %v382 = vld [vmem:[#allocation2 + $0x18] sm:$0xff]
        %v383 = vld [vmem:[#allocation2 + $0x20] sm:$0xff]
        %v384 = vld [vmem:[#allocation2 + $0x30] sm:$0xff]
        %v385 = vld [vmem:[#allocation2 + $0x38] sm:$0xff]
        %v386 = vld [vmem:[#allocation2 + $0x48] sm:$0xff]
        %v387 = vld [vmem:[#allocation2 + $0x50] sm:$0xff]
        %v388 = vld [vmem:[#allocation2 + $0x60] sm:$0xff]
        %v389 = vld [vmem:[#allocation2 + $0x68] sm:$0xff]
        %v390 = vld [vmem:[#allocation2 + $0x78] sm:$0xff]
        %v391 = vld [vmem:[#allocation2 + $0x80] sm:$0xff]
        %v392 = vld [vmem:[#allocation2 + $0x90] sm:$0xff]
        %v393 = vld [vmem:[#allocation2 + $0x98] sm:$0xff]
        %v394 = vld [vmem:[#allocation2 + $0xa8] sm:$0xff]
        %v395 = vld [vmem:[#allocation2 + $0xb0] sm:$0xff]
        %v396 = vld [vmem:[#allocation2 + $0xc0] sm:$0xff]
        %v397 = vld [vmem:[#allocation2 + $0xc8] sm:$0xff]
        %v398 = vld [vmem:[#allocation2 + $0xd8] sm:$0xff]
        %v399 = vld [vmem:[#allocation2 + $0xe0] sm:$0xff]
        %v400 = vld [vmem:[#allocation2 + $0xf0] sm:$0xff]
        %v401 = vld [vmem:[#allocation2 + $0xf8] sm:$0xff]
        %v402 = vld [vmem:[#allocation2 + $0x108] sm:$0xff]
        %v403 = vld [vmem:[#allocation2 + $0x110] sm:$0xff]
        %v404 = vld [vmem:[#allocation2 + $0x120] sm:$0xff]
        %v405 = vld [vmem:[#allocation2 + $0x128] sm:$0xff]
        %v406 = vld [vmem:[#allocation2 + $0x138] sm:$0xff]
        %v407 = vld [vmem:[#allocation2 + $0x140] sm:$0xff]
        %v408 = vld [vmem:[#allocation2 + $0x150] sm:$0xff]
        %v409 = vld [vmem:[#allocation2 + $0x158] sm:$0xff]
        %v410 = vld [vmem:[#allocation2 + $0x168] sm:$0xff]
        %v411 = vld [vmem:[#allocation2 + $0x170] sm:$0xff]
        %v412 = vlaneseq
        %v413 = vshrl.u32 %v412, 7
        %v414 = vsub.s32 0, %v413
        %v415 = vrot.slane %v376, %v414
        %v416 = vmul.f32 %v380, %v415
        %v417 = vmul.f32 %v381, %v415
        %v418 = vmul.f32 %v382, %v415
        %v419 = vmul.f32 %v383, %v415
        %v420 = vmul.f32 %v384, %v415
        %v421 = vmul.f32 %v385, %v415
        %v422 = vmul.f32 %v386, %v415
        %v423 = vmul.f32 %v387, %v415
        %v424 = vmul.f32 %v388, %v415
        %v425 = vmul.f32 %v389, %v415
        %v426 = vmul.f32 %v390, %v415
        %v427 = vmul.f32 %v391, %v415
        %v428 = vmul.f32 %v392, %v415
        %v429 = vmul.f32 %v393, %v415
        %v430 = vmul.f32 %v394, %v415
        %v431 = vmul.f32 %v395, %v415
        %v432 = vmul.f32 %v396, %v415
        %v433 = vmul.f32 %v397, %v415
        %v434 = vmul.f32 %v398, %v415
        %v435 = vmul.f32 %v399, %v415
        %v436 = vmul.f32 %v400, %v415
        %v437 = vmul.f32 %v401, %v415
        %v438 = vmul.f32 %v402, %v415
        %v439 = vmul.f32 %v403, %v415
        %v440 = vmul.f32 %v404, %v415
        %v441 = vmul.f32 %v405, %v415
        %v442 = vmul.f32 %v406, %v415
        %v443 = vmul.f32 %v407, %v415
        %v444 = vmul.f32 %v408, %v415
        %v445 = vmul.f32 %v409, %v415
        %v446 = vmul.f32 %v410, %v415
        %v447 = vmul.f32 %v411, %v415
        %v448 = vld [vmem:[#allocation2 + $0x1] sm:$0xff]
        %v449 = vld [vmem:[#allocation2 + $0x9] sm:$0xff]
        %v450 = vld [vmem:[#allocation2 + $0x19] sm:$0xff]
        %v451 = vld [vmem:[#allocation2 + $0x21] sm:$0xff]
        %v452 = vld [vmem:[#allocation2 + $0x31] sm:$0xff]
        %v453 = vld [vmem:[#allocation2 + $0x39] sm:$0xff]
        %v454 = vld [vmem:[#allocation2 + $0x49] sm:$0xff]
        %v455 = vld [vmem:[#allocation2 + $0x51] sm:$0xff]
        %v456 = vld [vmem:[#allocation2 + $0x61] sm:$0xff]
        %v457 = vld [vmem:[#allocation2 + $0x69] sm:$0xff]
        %v458 = vld [vmem:[#allocation2 + $0x79] sm:$0xff]
        %v459 = vld [vmem:[#allocation2 + $0x81] sm:$0xff]
        %v460 = vld [vmem:[#allocation2 + $0x91] sm:$0xff]
        %v461 = vld [vmem:[#allocation2 + $0x99] sm:$0xff]
        %v462 = vld [vmem:[#allocation2 + $0xa9] sm:$0xff]
        %v463 = vld [vmem:[#allocation2 + $0xb1] sm:$0xff]
        %v464 = vld [vmem:[#allocation2 + $0xc1] sm:$0xff]
        %v465 = vld [vmem:[#allocation2 + $0xc9] sm:$0xff]
        %v466 = vld [vmem:[#allocation2 + $0xd9] sm:$0xff]
        %v467 = vld [vmem:[#allocation2 + $0xe1] sm:$0xff]
        %v468 = vld [vmem:[#allocation2 + $0xf1] sm:$0xff]
        %v469 = vld [vmem:[#allocation2 + $0xf9] sm:$0xff]
        %v470 = vld [vmem:[#allocation2 + $0x109] sm:$0xff]
        %v471 = vld [vmem:[#allocation2 + $0x111] sm:$0xff]
        %v472 = vld [vmem:[#allocation2 + $0x121] sm:$0xff]
        %v473 = vld [vmem:[#allocation2 + $0x129] sm:$0xff]
        %v474 = vld [vmem:[#allocation2 + $0x139] sm:$0xff]
        %v475 = vld [vmem:[#allocation2 + $0x141] sm:$0xff]
        %v476 = vld [vmem:[#allocation2 + $0x151] sm:$0xff]
        %v477 = vld [vmem:[#allocation2 + $0x159] sm:$0xff]
        %v478 = vld [vmem:[#allocation2 + $0x169] sm:$0xff]
        %v479 = vld [vmem:[#allocation2 + $0x171] sm:$0xff]
        %v480 = vlaneseq
        %v481 = vshrl.u32 %v480, 7
        %v482 = vsub.s32 1, %v481
        %v483 = vrot.slane %v376, %v482
        %v484 = vmul.f32 %v448, %v483
        %v485 = vmul.f32 %v449, %v483
        %v486 = vmul.f32 %v450, %v483
        %v487 = vmul.f32 %v451, %v483
        %v488 = vmul.f32 %v452, %v483
        %v489 = vmul.f32 %v453, %v483
        %v490 = vmul.f32 %v454, %v483
        %v491 = vmul.f32 %v455, %v483
        %v492 = vmul.f32 %v456, %v483
        %v493 = vmul.f32 %v457, %v483
        %v494 = vmul.f32 %v458, %v483
        %v495 = vmul.f32 %v459, %v483
        %v496 = vmul.f32 %v460, %v483
        %v497 = vmul.f32 %v461, %v483
        %v498 = vmul.f32 %v462, %v483
        %v499 = vmul.f32 %v463, %v483
        %v500 = vmul.f32 %v464, %v483
        %v501 = vmul.f32 %v465, %v483
        %v502 = vmul.f32 %v466, %v483
        %v503 = vmul.f32 %v467, %v483
        %v504 = vmul.f32 %v468, %v483
        %v505 = vmul.f32 %v469, %v483
        %v506 = vmul.f32 %v470, %v483
        %v507 = vmul.f32 %v471, %v483
        %v508 = vmul.f32 %v472, %v483
        %v509 = vmul.f32 %v473, %v483
        %v510 = vmul.f32 %v474, %v483
        %v511 = vmul.f32 %v475, %v483
        %v512 = vmul.f32 %v476, %v483
        %v513 = vmul.f32 %v477, %v483
        %v514 = vmul.f32 %v478, %v483
        %v515 = vmul.f32 %v479, %v483
        %v516 = vadd.f32 %v416, %v484
        %v517 = vadd.f32 %v417, %v485
        %v518 = vadd.f32 %v418, %v486
        %v519 = vadd.f32 %v419, %v487
        %v520 = vadd.f32 %v420, %v488
        %v521 = vadd.f32 %v421, %v489
        %v522 = vadd.f32 %v422, %v490
        %v523 = vadd.f32 %v423, %v491
        %v524 = vadd.f32 %v424, %v492
        %v525 = vadd.f32 %v425, %v493
        %v526 = vadd.f32 %v426, %v494
        %v527 = vadd.f32 %v427, %v495
        %v528 = vadd.f32 %v428, %v496
        %v529 = vadd.f32 %v429, %v497
        %v530 = vadd.f32 %v430, %v498
        %v531 = vadd.f32 %v431, %v499
        %v532 = vadd.f32 %v432, %v500
        %v533 = vadd.f32 %v433, %v501
        %v534 = vadd.f32 %v434, %v502
        %v535 = vadd.f32 %v435, %v503
        %v536 = vadd.f32 %v436, %v504
        %v537 = vadd.f32 %v437, %v505
        %v538 = vadd.f32 %v438, %v506
        %v539 = vadd.f32 %v439, %v507
        %v540 = vadd.f32 %v440, %v508
        %v541 = vadd.f32 %v441, %v509
        %v542 = vadd.f32 %v442, %v510
        %v543 = vadd.f32 %v443, %v511
        %v544 = vadd.f32 %v444, %v512
        %v545 = vadd.f32 %v445, %v513
        %v546 = vadd.f32 %v446, %v514
        %v547 = vadd.f32 %v447, %v515
        %v548 = vld [vmem:[#allocation2 + $0x2] sm:$0xff]
        %v549 = vld [vmem:[#allocation2 + $0xa] sm:$0xff]
        %v550 = vld [vmem:[#allocation2 + $0x1a] sm:$0xff]
        %v551 = vld [vmem:[#allocation2 + $0x22] sm:$0xff]
        %v552 = vld [vmem:[#allocation2 + $0x32] sm:$0xff]
        %v553 = vld [vmem:[#allocation2 + $0x3a] sm:$0xff]
        %v554 = vld [vmem:[#allocation2 + $0x4a] sm:$0xff]
        %v555 = vld [vmem:[#allocation2 + $0x52] sm:$0xff]
        %v556 = vld [vmem:[#allocation2 + $0x62] sm:$0xff]
        %v557 = vld [vmem:[#allocation2 + $0x6a] sm:$0xff]
        %v558 = vld [vmem:[#allocation2 + $0x7a] sm:$0xff]
        %v559 = vld [vmem:[#allocation2 + $0x82] sm:$0xff]
        %v560 = vld [vmem:[#allocation2 + $0x92] sm:$0xff]
        %v561 = vld [vmem:[#allocation2 + $0x9a] sm:$0xff]
        %v562 = vld [vmem:[#allocation2 + $0xaa] sm:$0xff]
        %v563 = vld [vmem:[#allocation2 + $0xb2] sm:$0xff]
        %v564 = vld [vmem:[#allocation2 + $0xc2] sm:$0xff]
        %v565 = vld [vmem:[#allocation2 + $0xca] sm:$0xff]
        %v566 = vld [vmem:[#allocation2 + $0xda] sm:$0xff]
        %v567 = vld [vmem:[#allocation2 + $0xe2] sm:$0xff]
        %v568 = vld [vmem:[#allocation2 + $0xf2] sm:$0xff]
        %v569 = vld [vmem:[#allocation2 + $0xfa] sm:$0xff]
        %v570 = vld [vmem:[#allocation2 + $0x10a] sm:$0xff]
        %v571 = vld [vmem:[#allocation2 + $0x112] sm:$0xff]
        %v572 = vld [vmem:[#allocation2 + $0x122] sm:$0xff]
        %v573 = vld [vmem:[#allocation2 + $0x12a] sm:$0xff]
        %v574 = vld [vmem:[#allocation2 + $0x13a] sm:$0xff]
        %v575 = vld [vmem:[#allocation2 + $0x142] sm:$0xff]
        %v576 = vld [vmem:[#allocation2 + $0x152] sm:$0xff]
        %v577 = vld [vmem:[#allocation2 + $0x15a] sm:$0xff]
        %v578 = vld [vmem:[#allocation2 + $0x16a] sm:$0xff]
        %v579 = vld [vmem:[#allocation2 + $0x172] sm:$0xff]
        %v580 = vlaneseq
        %v581 = vshrl.u32 %v580, 7
        %v582 = vsub.s32 2, %v581
        %v583 = vrot.slane %v376, %v582
        %v584 = vmul.f32 %v548, %v583
        %v585 = vmul.f32 %v549, %v583
        %v586 = vmul.f32 %v550, %v583
        %v587 = vmul.f32 %v551, %v583
        %v588 = vmul.f32 %v552, %v583
        %v589 = vmul.f32 %v553, %v583
        %v590 = vmul.f32 %v554, %v583
        %v591 = vmul.f32 %v555, %v583
        %v592 = vmul.f32 %v556, %v583
        %v593 = vmul.f32 %v557, %v583
        %v594 = vmul.f32 %v558, %v583
        %v595 = vmul.f32 %v559, %v583
        %v596 = vmul.f32 %v560, %v583
        %v597 = vmul.f32 %v561, %v583
        %v598 = vmul.f32 %v562, %v583
        %v599 = vmul.f32 %v563, %v583
        %v600 = vmul.f32 %v564, %v583
        %v601 = vmul.f32 %v565, %v583
        %v602 = vmul.f32 %v566, %v583
        %v603 = vmul.f32 %v567, %v583
        %v604 = vmul.f32 %v568, %v583
        %v605 = vmul.f32 %v569, %v583
        %v606 = vmul.f32 %v570, %v583
        %v607 = vmul.f32 %v571, %v583
        %v608 = vmul.f32 %v572, %v583
        %v609 = vmul.f32 %v573, %v583
        %v610 = vmul.f32 %v574, %v583
        %v611 = vmul.f32 %v575, %v583
        %v612 = vmul.f32 %v576, %v583
        %v613 = vmul.f32 %v577, %v583
        %v614 = vmul.f32 %v578, %v583
        %v615 = vmul.f32 %v579, %v583
        %v616 = vadd.f32 %v516, %v584
        %v617 = vadd.f32 %v517, %v585
        %v618 = vadd.f32 %v518, %v586
        %v619 = vadd.f32 %v519, %v587
        %v620 = vadd.f32 %v520, %v588
        %v621 = vadd.f32 %v521, %v589
        %v622 = vadd.f32 %v522, %v590
        %v623 = vadd.f32 %v523, %v591
        %v624 = vadd.f32 %v524, %v592
        %v625 = vadd.f32 %v525, %v593
        %v626 = vadd.f32 %v526, %v594
        %v627 = vadd.f32 %v527, %v595
        %v628 = vadd.f32 %v528, %v596
        %v629 = vadd.f32 %v529, %v597
        %v630 = vadd.f32 %v530, %v598
        %v631 = vadd.f32 %v531, %v599
        %v632 = vadd.f32 %v532, %v600
        %v633 = vadd.f32 %v533, %v601
        %v634 = vadd.f32 %v534, %v602
        %v635 = vadd.f32 %v535, %v603
        %v636 = vadd.f32 %v536, %v604
        %v637 = vadd.f32 %v537, %v605
        %v638 = vadd.f32 %v538, %v606
        %v639 = vadd.f32 %v539, %v607
        %v640 = vadd.f32 %v540, %v608
        %v641 = vadd.f32 %v541, %v609
        %v642 = vadd.f32 %v542, %v610
        %v643 = vadd.f32 %v543, %v611
        %v644 = vadd.f32 %v544, %v612
        %v645 = vadd.f32 %v545, %v613
        %v646 = vadd.f32 %v546, %v614
        %v647 = vadd.f32 %v547, %v615
        %v648 = vld [vmem:[%s343] sm:$0xff]
        %v649 = vld [vmem:[%s343 + $0x8] sm:$0xff]
        %v650 = vld [vmem:[%s343 + $0x18] sm:$0xff]
        %v651 = vld [vmem:[%s343 + $0x20] sm:$0xff]
        %v652 = vld [vmem:[%s343 + $0x30] sm:$0xff]
        %v653 = vld [vmem:[%s343 + $0x38] sm:$0xff]
        %v654 = vld [vmem:[%s343 + $0x48] sm:$0xff]
        %v655 = vld [vmem:[%s343 + $0x50] sm:$0xff]
        %v656 = vld [vmem:[%s343 + $0x60] sm:$0xff]
        %v657 = vld [vmem:[%s343 + $0x68] sm:$0xff]
        %v658 = vld [vmem:[%s343 + $0x78] sm:$0xff]
        %v659 = vld [vmem:[%s343 + $0x80] sm:$0xff]
        %v660 = vld [vmem:[%s343 + $0x90] sm:$0xff]
        %v661 = vld [vmem:[%s343 + $0x98] sm:$0xff]
        %v662 = vld [vmem:[%s343 + $0xa8] sm:$0xff]
        %v663 = vld [vmem:[%s343 + $0xb0] sm:$0xff]
        %v664 = vld [vmem:[%s343 + $0xc0] sm:$0xff]
        %v665 = vld [vmem:[%s343 + $0xc8] sm:$0xff]
        %v666 = vld [vmem:[%s343 + $0xd8] sm:$0xff]
        %v667 = vld [vmem:[%s343 + $0xe0] sm:$0xff]
        %v668 = vld [vmem:[%s343 + $0xf0] sm:$0xff]
        %v669 = vld [vmem:[%s343 + $0xf8] sm:$0xff]
        %v670 = vld [vmem:[%s343 + $0x108] sm:$0xff]
        %v671 = vld [vmem:[%s343 + $0x110] sm:$0xff]
        %v672 = vld [vmem:[%s343 + $0x120] sm:$0xff]
        %v673 = vld [vmem:[%s343 + $0x128] sm:$0xff]
        %v674 = vld [vmem:[%s343 + $0x138] sm:$0xff]
        %v675 = vld [vmem:[%s343 + $0x140] sm:$0xff]
        %v676 = vld [vmem:[%s343 + $0x150] sm:$0xff]
        %v677 = vld [vmem:[%s343 + $0x158] sm:$0xff]
        %v678 = vld [vmem:[%s343 + $0x168] sm:$0xff]
        %v679 = vld [vmem:[%s343 + $0x170] sm:$0xff]
        %v680 = vlaneseq
        %v681 = vshrl.u32 %v680, 7
        %v682 = vsub.s32 0, %v681
        %v683 = vrot.slane %v377, %v682
        %v684 = vmul.f32 %v648, %v683
        %v685 = vmul.f32 %v649, %v683
        %v686 = vmul.f32 %v650, %v683
        %v687 = vmul.f32 %v651, %v683
        %v688 = vmul.f32 %v652, %v683
        %v689 = vmul.f32 %v653, %v683
        %v690 = vmul.f32 %v654, %v683
        %v691 = vmul.f32 %v655, %v683
        %v692 = vmul.f32 %v656, %v683
        %v693 = vmul.f32 %v657, %v683
        %v694 = vmul.f32 %v658, %v683
        %v695 = vmul.f32 %v659, %v683
        %v696 = vmul.f32 %v660, %v683
        %v697 = vmul.f32 %v661, %v683
        %v698 = vmul.f32 %v662, %v683
        %v699 = vmul.f32 %v663, %v683
        %v700 = vmul.f32 %v664, %v683
        %v701 = vmul.f32 %v665, %v683
        %v702 = vmul.f32 %v666, %v683
        %v703 = vmul.f32 %v667, %v683
        %v704 = vmul.f32 %v668, %v683
        %v705 = vmul.f32 %v669, %v683
        %v706 = vmul.f32 %v670, %v683
        %v707 = vmul.f32 %v671, %v683
        %v708 = vmul.f32 %v672, %v683
        %v709 = vmul.f32 %v673, %v683
        %v710 = vmul.f32 %v674, %v683
        %v711 = vmul.f32 %v675, %v683
        %v712 = vmul.f32 %v676, %v683
        %v713 = vmul.f32 %v677, %v683
        %v714 = vmul.f32 %v678, %v683
        %v715 = vmul.f32 %v679, %v683
        %v716 = vadd.f32 %v616, %v684
        %v717 = vadd.f32 %v617, %v685
        %v718 = vadd.f32 %v618, %v686
        %v719 = vadd.f32 %v619, %v687
        %v720 = vadd.f32 %v620, %v688
        %v721 = vadd.f32 %v621, %v689
        %v722 = vadd.f32 %v622, %v690
        %v723 = vadd.f32 %v623, %v691
        %v724 = vadd.f32 %v624, %v692
        %v725 = vadd.f32 %v625, %v693
        %v726 = vadd.f32 %v626, %v694
        %v727 = vadd.f32 %v627, %v695
        %v728 = vadd.f32 %v628, %v696
        %v729 = vadd.f32 %v629, %v697
        %v730 = vadd.f32 %v630, %v698
        %v731 = vadd.f32 %v631, %v699
        %v732 = vadd.f32 %v632, %v700
        %v733 = vadd.f32 %v633, %v701
        %v734 = vadd.f32 %v634, %v702
        %v735 = vadd.f32 %v635, %v703
        %v736 = vadd.f32 %v636, %v704
        %v737 = vadd.f32 %v637, %v705
        %v738 = vadd.f32 %v638, %v706
        %v739 = vadd.f32 %v639, %v707
        %v740 = vadd.f32 %v640, %v708
        %v741 = vadd.f32 %v641, %v709
        %v742 = vadd.f32 %v642, %v710
        %v743 = vadd.f32 %v643, %v711
        %v744 = vadd.f32 %v644, %v712
        %v745 = vadd.f32 %v645, %v713
        %v746 = vadd.f32 %v646, %v714
        %v747 = vadd.f32 %v647, %v715
        %v748 = vld [vmem:[%s343 + $0x1] sm:$0xff]
        %v749 = vld [vmem:[%s343 + $0x9] sm:$0xff]
        %v750 = vld [vmem:[%s343 + $0x19] sm:$0xff]
        %v751 = vld [vmem:[%s343 + $0x21] sm:$0xff]
        %v752 = vld [vmem:[%s343 + $0x31] sm:$0xff]
        %v753 = vld [vmem:[%s343 + $0x39] sm:$0xff]
        %v754 = vld [vmem:[%s343 + $0x49] sm:$0xff]
        %v755 = vld [vmem:[%s343 + $0x51] sm:$0xff]
        %v756 = vld [vmem:[%s343 + $0x61] sm:$0xff]
        %v757 = vld [vmem:[%s343 + $0x69] sm:$0xff]
        %v758 = vld [vmem:[%s343 + $0x79] sm:$0xff]
        %v759 = vld [vmem:[%s343 + $0x81] sm:$0xff]
        %v760 = vld [vmem:[%s343 + $0x91] sm:$0xff]
        %v761 = vld [vmem:[%s343 + $0x99] sm:$0xff]
        %v762 = vld [vmem:[%s343 + $0xa9] sm:$0xff]
        %v763 = vld [vmem:[%s343 + $0xb1] sm:$0xff]
        %v764 = vld [vmem:[%s343 + $0xc1] sm:$0xff]
        %v765 = vld [vmem:[%s343 + $0xc9] sm:$0xff]
        %v766 = vld [vmem:[%s343 + $0xd9] sm:$0xff]
        %v767 = vld [vmem:[%s343 + $0xe1] sm:$0xff]
        %v768 = vld [vmem:[%s343 + $0xf1] sm:$0xff]
        %v769 = vld [vmem:[%s343 + $0xf9] sm:$0xff]
        %v770 = vld [vmem:[%s343 + $0x109] sm:$0xff]
        %v771 = vld [vmem:[%s343 + $0x111] sm:$0xff]
        %v772 = vld [vmem:[%s343 + $0x121] sm:$0xff]
        %v773 = vld [vmem:[%s343 + $0x129] sm:$0xff]
        %v774 = vld [vmem:[%s343 + $0x139] sm:$0xff]
        %v775 = vld [vmem:[%s343 + $0x141] sm:$0xff]
        %v776 = vld [vmem:[%s343 + $0x151] sm:$0xff]
        %v777 = vld [vmem:[%s343 + $0x159] sm:$0xff]
        %v778 = vld [vmem:[%s343 + $0x169] sm:$0xff]
        %v779 = vld [vmem:[%s343 + $0x171] sm:$0xff]
        %v780 = vlaneseq
        %v781 = vshrl.u32 %v780, 7
        %v782 = vsub.s32 1, %v781
        %v783 = vrot.slane %v377, %v782
        %v784 = vmul.f32 %v748, %v783
        %v785 = vmul.f32 %v749, %v783
        %v786 = vmul.f32 %v750, %v783
        %v787 = vmul.f32 %v751, %v783
        %v788 = vmul.f32 %v752, %v783
        %v789 = vmul.f32 %v753, %v783
        %v790 = vmul.f32 %v754, %v783
        %v791 = vmul.f32 %v755, %v783
        %v792 = vmul.f32 %v756, %v783
        %v793 = vmul.f32 %v757, %v783
        %v794 = vmul.f32 %v758, %v783
        %v795 = vmul.f32 %v759, %v783
        %v796 = vmul.f32 %v760, %v783
        %v797 = vmul.f32 %v761, %v783
        %v798 = vmul.f32 %v762, %v783
        %v799 = vmul.f32 %v763, %v783
        %v800 = vmul.f32 %v764, %v783
        %v801 = vmul.f32 %v765, %v783
        %v802 = vmul.f32 %v766, %v783
        %v803 = vmul.f32 %v767, %v783
        %v804 = vmul.f32 %v768, %v783
        %v805 = vmul.f32 %v769, %v783
        %v806 = vmul.f32 %v770, %v783
        %v807 = vmul.f32 %v771, %v783
        %v808 = vmul.f32 %v772, %v783
        %v809 = vmul.f32 %v773, %v783
        %v810 = vmul.f32 %v774, %v783
        %v811 = vmul.f32 %v775, %v783
        %v812 = vmul.f32 %v776, %v783
        %v813 = vmul.f32 %v777, %v783
        %v814 = vmul.f32 %v778, %v783
        %v815 = vmul.f32 %v779, %v783
        %v816 = vadd.f32 %v716, %v784
        %v817 = vadd.f32 %v717, %v785
        %v818 = vadd.f32 %v718, %v786
        %v819 = vadd.f32 %v719, %v787
        %v820 = vadd.f32 %v720, %v788
        %v821 = vadd.f32 %v721, %v789
        %v822 = vadd.f32 %v722, %v790
        %v823 = vadd.f32 %v723, %v791
        %v824 = vadd.f32 %v724, %v792
        %v825 = vadd.f32 %v725, %v793
        %v826 = vadd.f32 %v726, %v794
        %v827 = vadd.f32 %v727, %v795
        %v828 = vadd.f32 %v728, %v796
        %v829 = vadd.f32 %v729, %v797
        %v830 = vadd.f32 %v730, %v798
        %v831 = vadd.f32 %v731, %v799
        %v832 = vadd.f32 %v732, %v800
        %v833 = vadd.f32 %v733, %v801
        %v834 = vadd.f32 %v734, %v802
        %v835 = vadd.f32 %v735, %v803
        %v836 = vadd.f32 %v736, %v804
        %v837 = vadd.f32 %v737, %v805
        %v838 = vadd.f32 %v738, %v806
        %v839 = vadd.f32 %v739, %v807
        %v840 = vadd.f32 %v740, %v808
        %v841 = vadd.f32 %v741, %v809
        %v842 = vadd.f32 %v742, %v810
        %v843 = vadd.f32 %v743, %v811
        %v844 = vadd.f32 %v744, %v812
        %v845 = vadd.f32 %v745, %v813
        %v846 = vadd.f32 %v746, %v814
        %v847 = vadd.f32 %v747, %v815
        %v848 = vld [vmem:[%s343 + $0x2] sm:$0xff]
        %v849 = vld [vmem:[%s343 + $0xa] sm:$0xff]
        %v850 = vld [vmem:[%s343 + $0x1a] sm:$0xff]
        %v851 = vld [vmem:[%s343 + $0x22] sm:$0xff]
        %v852 = vld [vmem:[%s343 + $0x32] sm:$0xff]
        %v853 = vld [vmem:[%s343 + $0x3a] sm:$0xff]
        %v854 = vld [vmem:[%s343 + $0x4a] sm:$0xff]
        %v855 = vld [vmem:[%s343 + $0x52] sm:$0xff]
        %v856 = vld [vmem:[%s343 + $0x62] sm:$0xff]
        %v857 = vld [vmem:[%s343 + $0x6a] sm:$0xff]
        %v858 = vld [vmem:[%s343 + $0x7a] sm:$0xff]
        %v859 = vld [vmem:[%s343 + $0x82] sm:$0xff]
        %v860 = vld [vmem:[%s343 + $0x92] sm:$0xff]
        %v861 = vld [vmem:[%s343 + $0x9a] sm:$0xff]
        %v862 = vld [vmem:[%s343 + $0xaa] sm:$0xff]
        %v863 = vld [vmem:[%s343 + $0xb2] sm:$0xff]
        %v864 = vld [vmem:[%s343 + $0xc2] sm:$0xff]
        %v865 = vld [vmem:[%s343 + $0xca] sm:$0xff]
        %v866 = vld [vmem:[%s343 + $0xda] sm:$0xff]
        %v867 = vld [vmem:[%s343 + $0xe2] sm:$0xff]
        %v868 = vld [vmem:[%s343 + $0xf2] sm:$0xff]
        %v869 = vld [vmem:[%s343 + $0xfa] sm:$0xff]
        %v870 = vld [vmem:[%s343 + $0x10a] sm:$0xff]
        %v871 = vld [vmem:[%s343 + $0x112] sm:$0xff]
        %v872 = vld [vmem:[%s343 + $0x122] sm:$0xff]
        %v873 = vld [vmem:[%s343 + $0x12a] sm:$0xff]
        %v874 = vld [vmem:[%s343 + $0x13a] sm:$0xff]
        %v875 = vld [vmem:[%s343 + $0x142] sm:$0xff]
        %v876 = vld [vmem:[%s343 + $0x152] sm:$0xff]
        %v877 = vld [vmem:[%s343 + $0x15a] sm:$0xff]
        %v878 = vld [vmem:[%s343 + $0x16a] sm:$0xff]
        %v879 = vld [vmem:[%s343 + $0x172] sm:$0xff]
        %v880 = vlaneseq
        %v881 = vshrl.u32 %v880, 7
        %v882 = vsub.s32 2, %v881
        %v883 = vrot.slane %v377, %v882
        %v884 = vmul.f32 %v848, %v883
        %v885 = vmul.f32 %v849, %v883
        %v886 = vmul.f32 %v850, %v883
        %v887 = vmul.f32 %v851, %v883
        %v888 = vmul.f32 %v852, %v883
        %v889 = vmul.f32 %v853, %v883
        %v890 = vmul.f32 %v854, %v883
        %v891 = vmul.f32 %v855, %v883
        %v892 = vmul.f32 %v856, %v883
        %v893 = vmul.f32 %v857, %v883
        %v894 = vmul.f32 %v858, %v883
        %v895 = vmul.f32 %v859, %v883
        %v896 = vmul.f32 %v860, %v883
        %v897 = vmul.f32 %v861, %v883
        %v898 = vmul.f32 %v862, %v883
        %v899 = vmul.f32 %v863, %v883
        %v900 = vmul.f32 %v864, %v883
        %v901 = vmul.f32 %v865, %v883
        %v902 = vmul.f32 %v866, %v883
        %v903 = vmul.f32 %v867, %v883
        %v904 = vmul.f32 %v868, %v883
        %v905 = vmul.f32 %v869, %v883
        %v906 = vmul.f32 %v870, %v883
        %v907 = vmul.f32 %v871, %v883
        %v908 = vmul.f32 %v872, %v883
        %v909 = vmul.f32 %v873, %v883
        %v910 = vmul.f32 %v874, %v883
        %v911 = vmul.f32 %v875, %v883
        %v912 = vmul.f32 %v876, %v883
        %v913 = vmul.f32 %v877, %v883
        %v914 = vmul.f32 %v878, %v883
        %v915 = vmul.f32 %v879, %v883
        %v916 = vadd.f32 %v816, %v884
        %v917 = vadd.f32 %v817, %v885
        %v918 = vadd.f32 %v818, %v886
        %v919 = vadd.f32 %v819, %v887
        %v920 = vadd.f32 %v820, %v888
        %v921 = vadd.f32 %v821, %v889
        %v922 = vadd.f32 %v822, %v890
        %v923 = vadd.f32 %v823, %v891
        %v924 = vadd.f32 %v824, %v892
        %v925 = vadd.f32 %v825, %v893
        %v926 = vadd.f32 %v826, %v894
        %v927 = vadd.f32 %v827, %v895
        %v928 = vadd.f32 %v828, %v896
        %v929 = vadd.f32 %v829, %v897
        %v930 = vadd.f32 %v830, %v898
        %v931 = vadd.f32 %v831, %v899
        %v932 = vadd.f32 %v832, %v900
        %v933 = vadd.f32 %v833, %v901
        %v934 = vadd.f32 %v834, %v902
        %v935 = vadd.f32 %v835, %v903
        %v936 = vadd.f32 %v836, %v904
        %v937 = vadd.f32 %v837, %v905
        %v938 = vadd.f32 %v838, %v906
        %v939 = vadd.f32 %v839, %v907
        %v940 = vadd.f32 %v840, %v908
        %v941 = vadd.f32 %v841, %v909
        %v942 = vadd.f32 %v842, %v910
        %v943 = vadd.f32 %v843, %v911
        %v944 = vadd.f32 %v844, %v912
        %v945 = vadd.f32 %v845, %v913
        %v946 = vadd.f32 %v846, %v914
        %v947 = vadd.f32 %v847, %v915
        %s948 = scalar_lea.vmem [#allocation2], 48
        %v949 = vld [vmem:[%s948] sm:$0xff]
        %v950 = vld [vmem:[%s948 + $0x8] sm:$0xff]
        %v951 = vld [vmem:[%s948 + $0x18] sm:$0xff]
        %v952 = vld [vmem:[%s948 + $0x20] sm:$0xff]
        %v953 = vld [vmem:[%s948 + $0x30] sm:$0xff]
        %v954 = vld [vmem:[%s948 + $0x38] sm:$0xff]
        %v955 = vld [vmem:[%s948 + $0x48] sm:$0xff]
        %v956 = vld [vmem:[%s948 + $0x50] sm:$0xff]
        %v957 = vld [vmem:[%s948 + $0x60] sm:$0xff]
        %v958 = vld [vmem:[%s948 + $0x68] sm:$0xff]
        %v959 = vld [vmem:[%s948 + $0x78] sm:$0xff]
        %v960 = vld [vmem:[%s948 + $0x80] sm:$0xff]
        %v961 = vld [vmem:[%s948 + $0x90] sm:$0xff]
        %v962 = vld [vmem:[%s948 + $0x98] sm:$0xff]
        %v963 = vld [vmem:[%s948 + $0xa8] sm:$0xff]
        %v964 = vld [vmem:[%s948 + $0xb0] sm:$0xff]
        %v965 = vld [vmem:[%s948 + $0xc0] sm:$0xff]
        %v966 = vld [vmem:[%s948 + $0xc8] sm:$0xff]
        %v967 = vld [vmem:[%s948 + $0xd8] sm:$0xff]
        %v968 = vld [vmem:[%s948 + $0xe0] sm:$0xff]
        %v969 = vld [vmem:[%s948 + $0xf0] sm:$0xff]
        %v970 = vld [vmem:[%s948 + $0xf8] sm:$0xff]
        %v971 = vld [vmem:[%s948 + $0x108] sm:$0xff]
        %v972 = vld [vmem:[%s948 + $0x110] sm:$0xff]
        %v973 = vld [vmem:[%s948 + $0x120] sm:$0xff]
        %v974 = vld [vmem:[%s948 + $0x128] sm:$0xff]
        %v975 = vld [vmem:[%s948 + $0x138] sm:$0xff]
        %v976 = vld [vmem:[%s948 + $0x140] sm:$0xff]
        %v977 = vld [vmem:[%s948 + $0x150] sm:$0xff]
        %v978 = vld [vmem:[%s948 + $0x158] sm:$0xff]
        %v979 = vld [vmem:[%s948 + $0x168] sm:$0xff]
        %v980 = vld [vmem:[%s948 + $0x170] sm:$0xff]
        %v981 = vlaneseq
        %v982 = vshrl.u32 %v981, 7
        %v983 = vsub.s32 0, %v982
        %v984 = vrot.slane %v378, %v983
        %v985 = vmul.f32 %v949, %v984
        %v986 = vmul.f32 %v950, %v984
        %v987 = vmul.f32 %v951, %v984
        %v988 = vmul.f32 %v952, %v984
        %v989 = vmul.f32 %v953, %v984
        %v990 = vmul.f32 %v954, %v984
        %v991 = vmul.f32 %v955, %v984
        %v992 = vmul.f32 %v956, %v984
        %v993 = vmul.f32 %v957, %v984
        %v994 = vmul.f32 %v958, %v984
        %v995 = vmul.f32 %v959, %v984
        %v996 = vmul.f32 %v960, %v984
        %v997 = vmul.f32 %v961, %v984
        %v998 = vmul.f32 %v962, %v984
        %v999 = vmul.f32 %v963, %v984
        %v1000 = vmul.f32 %v964, %v984
        %v1001 = vmul.f32 %v965, %v984
        %v1002 = vmul.f32 %v966, %v984
        %v1003 = vmul.f32 %v967, %v984
        %v1004 = vmul.f32 %v968, %v984
        %v1005 = vmul.f32 %v969, %v984
        %v1006 = vmul.f32 %v970, %v984
        %v1007 = vmul.f32 %v971, %v984
        %v1008 = vmul.f32 %v972, %v984
        %v1009 = vmul.f32 %v973, %v984
        %v1010 = vmul.f32 %v974, %v984
        %v1011 = vmul.f32 %v975, %v984
        %v1012 = vmul.f32 %v976, %v984
        %v1013 = vmul.f32 %v977, %v984
        %v1014 = vmul.f32 %v978, %v984
        %v1015 = vmul.f32 %v979, %v984
        %v1016 = vmul.f32 %v980, %v984
        %v1017 = vadd.f32 %v916, %v985
        %v1018 = vadd.f32 %v917, %v986
        %v1019 = vadd.f32 %v918, %v987
        %v1020 = vadd.f32 %v919, %v988
        %v1021 = vadd.f32 %v920, %v989
        %v1022 = vadd.f32 %v921, %v990
        %v1023 = vadd.f32 %v922, %v991
        %v1024 = vadd.f32 %v923, %v992
        %v1025 = vadd.f32 %v924, %v993
        %v1026 = vadd.f32 %v925, %v994
        %v1027 = vadd.f32 %v926, %v995
        %v1028 = vadd.f32 %v927, %v996
        %v1029 = vadd.f32 %v928, %v997
        %v1030 = vadd.f32 %v929, %v998
        %v1031 = vadd.f32 %v930, %v999
        %v1032 = vadd.f32 %v931, %v1000
        %v1033 = vadd.f32 %v932, %v1001
        %v1034 = vadd.f32 %v933, %v1002
        %v1035 = vadd.f32 %v934, %v1003
        %v1036 = vadd.f32 %v935, %v1004
        %v1037 = vadd.f32 %v936, %v1005
        %v1038 = vadd.f32 %v937, %v1006
        %v1039 = vadd.f32 %v938, %v1007
        %v1040 = vadd.f32 %v939, %v1008
        %v1041 = vadd.f32 %v940, %v1009
        %v1042 = vadd.f32 %v941, %v1010
        %v1043 = vadd.f32 %v942, %v1011
        %v1044 = vadd.f32 %v943, %v1012
        %v1045 = vadd.f32 %v944, %v1013
        %v1046 = vadd.f32 %v945, %v1014
        %v1047 = vadd.f32 %v946, %v1015
        %v1048 = vadd.f32 %v947, %v1016
        %v1049 = vld [vmem:[%s948 + $0x1] sm:$0xff]
        %v1050 = vld [vmem:[%s948 + $0x9] sm:$0xff]
        %v1051 = vld [vmem:[%s948 + $0x19] sm:$0xff]
        %v1052 = vld [vmem:[%s948 + $0x21] sm:$0xff]
        %v1053 = vld [vmem:[%s948 + $0x31] sm:$0xff]
        %v1054 = vld [vmem:[%s948 + $0x39] sm:$0xff]
        %v1055 = vld [vmem:[%s948 + $0x49] sm:$0xff]
        %v1056 = vld [vmem:[%s948 + $0x51] sm:$0xff]
        %v1057 = vld [vmem:[%s948 + $0x61] sm:$0xff]
        %v1058 = vld [vmem:[%s948 + $0x69] sm:$0xff]
        %v1059 = vld [vmem:[%s948 + $0x79] sm:$0xff]
        %v1060 = vld [vmem:[%s948 + $0x81] sm:$0xff]
        %v1061 = vld [vmem:[%s948 + $0x91] sm:$0xff]
        %v1062 = vld [vmem:[%s948 + $0x99] sm:$0xff]
        %v1063 = vld [vmem:[%s948 + $0xa9] sm:$0xff]
        %v1064 = vld [vmem:[%s948 + $0xb1] sm:$0xff]
        %v1065 = vld [vmem:[%s948 + $0xc1] sm:$0xff]
        %v1066 = vld [vmem:[%s948 + $0xc9] sm:$0xff]
        %v1067 = vld [vmem:[%s948 + $0xd9] sm:$0xff]
        %v1068 = vld [vmem:[%s948 + $0xe1] sm:$0xff]
        %v1069 = vld [vmem:[%s948 + $0xf1] sm:$0xff]
        %v1070 = vld [vmem:[%s948 + $0xf9] sm:$0xff]
        %v1071 = vld [vmem:[%s948 + $0x109] sm:$0xff]
        %v1072 = vld [vmem:[%s948 + $0x111] sm:$0xff]
        %v1073 = vld [vmem:[%s948 + $0x121] sm:$0xff]
        %v1074 = vld [vmem:[%s948 + $0x129] sm:$0xff]
        %v1075 = vld [vmem:[%s948 + $0x139] sm:$0xff]
        %v1076 = vld [vmem:[%s948 + $0x141] sm:$0xff]
        %v1077 = vld [vmem:[%s948 + $0x151] sm:$0xff]
        %v1078 = vld [vmem:[%s948 + $0x159] sm:$0xff]
        %v1079 = vld [vmem:[%s948 + $0x169] sm:$0xff]
        %v1080 = vld [vmem:[%s948 + $0x171] sm:$0xff]
        %v1081 = vlaneseq
        %v1082 = vshrl.u32 %v1081, 7
        %v1083 = vsub.s32 1, %v1082
        %v1084 = vrot.slane %v378, %v1083
        %v1085 = vmul.f32 %v1049, %v1084
        %v1086 = vmul.f32 %v1050, %v1084
        %v1087 = vmul.f32 %v1051, %v1084
        %v1088 = vmul.f32 %v1052, %v1084
        %v1089 = vmul.f32 %v1053, %v1084
        %v1090 = vmul.f32 %v1054, %v1084
        %v1091 = vmul.f32 %v1055, %v1084
        %v1092 = vmul.f32 %v1056, %v1084
        %v1093 = vmul.f32 %v1057, %v1084
        %v1094 = vmul.f32 %v1058, %v1084
        %v1095 = vmul.f32 %v1059, %v1084
        %v1096 = vmul.f32 %v1060, %v1084
        %v1097 = vmul.f32 %v1061, %v1084
        %v1098 = vmul.f32 %v1062, %v1084
        %v1099 = vmul.f32 %v1063, %v1084
        %v1100 = vmul.f32 %v1064, %v1084
        %v1101 = vmul.f32 %v1065, %v1084
        %v1102 = vmul.f32 %v1066, %v1084
        %v1103 = vmul.f32 %v1067, %v1084
        %v1104 = vmul.f32 %v1068, %v1084
        %v1105 = vmul.f32 %v1069, %v1084
        %v1106 = vmul.f32 %v1070, %v1084
        %v1107 = vmul.f32 %v1071, %v1084
        %v1108 = vmul.f32 %v1072, %v1084
        %v1109 = vmul.f32 %v1073, %v1084
        %v1110 = vmul.f32 %v1074, %v1084
        %v1111 = vmul.f32 %v1075, %v1084
        %v1112 = vmul.f32 %v1076, %v1084
        %v1113 = vmul.f32 %v1077, %v1084
        %v1114 = vmul.f32 %v1078, %v1084
        %v1115 = vmul.f32 %v1079, %v1084
        %v1116 = vmul.f32 %v1080, %v1084
        %v1117 = vadd.f32 %v1017, %v1085
        %v1118 = vadd.f32 %v1018, %v1086
        %v1119 = vadd.f32 %v1019, %v1087
        %v1120 = vadd.f32 %v1020, %v1088
        %v1121 = vadd.f32 %v1021, %v1089
        %v1122 = vadd.f32 %v1022, %v1090
        %v1123 = vadd.f32 %v1023, %v1091
        %v1124 = vadd.f32 %v1024, %v1092
        %v1125 = vadd.f32 %v1025, %v1093
        %v1126 = vadd.f32 %v1026, %v1094
        %v1127 = vadd.f32 %v1027, %v1095
        %v1128 = vadd.f32 %v1028, %v1096
        %v1129 = vadd.f32 %v1029, %v1097
        %v1130 = vadd.f32 %v1030, %v1098
        %v1131 = vadd.f32 %v1031, %v1099
        %v1132 = vadd.f32 %v1032, %v1100
        %v1133 = vadd.f32 %v1033, %v1101
        %v1134 = vadd.f32 %v1034, %v1102
        %v1135 = vadd.f32 %v1035, %v1103
        %v1136 = vadd.f32 %v1036, %v1104
        %v1137 = vadd.f32 %v1037, %v1105
        %v1138 = vadd.f32 %v1038, %v1106
        %v1139 = vadd.f32 %v1039, %v1107
        %v1140 = vadd.f32 %v1040, %v1108
        %v1141 = vadd.f32 %v1041, %v1109
        %v1142 = vadd.f32 %v1042, %v1110
        %v1143 = vadd.f32 %v1043, %v1111
        %v1144 = vadd.f32 %v1044, %v1112
        %v1145 = vadd.f32 %v1045, %v1113
        %v1146 = vadd.f32 %v1046, %v1114
        %v1147 = vadd.f32 %v1047, %v1115
        %v1148 = vadd.f32 %v1048, %v1116
        %v1149 = vld [vmem:[%s948 + $0x2] sm:$0xff]
        %v1150 = vld [vmem:[%s948 + $0xa] sm:$0xff]
        %v1151 = vld [vmem:[%s948 + $0x1a] sm:$0xff]
        %v1152 = vld [vmem:[%s948 + $0x22] sm:$0xff]
        %v1153 = vld [vmem:[%s948 + $0x32] sm:$0xff]
        %v1154 = vld [vmem:[%s948 + $0x3a] sm:$0xff]
        %v1155 = vld [vmem:[%s948 + $0x4a] sm:$0xff]
        %v1156 = vld [vmem:[%s948 + $0x52] sm:$0xff]
        %v1157 = vld [vmem:[%s948 + $0x62] sm:$0xff]
        %v1158 = vld [vmem:[%s948 + $0x6a] sm:$0xff]
        %v1159 = vld [vmem:[%s948 + $0x7a] sm:$0xff]
        %v1160 = vld [vmem:[%s948 + $0x82] sm:$0xff]
        %v1161 = vld [vmem:[%s948 + $0x92] sm:$0xff]
        %v1162 = vld [vmem:[%s948 + $0x9a] sm:$0xff]
        %v1163 = vld [vmem:[%s948 + $0xaa] sm:$0xff]
        %v1164 = vld [vmem:[%s948 + $0xb2] sm:$0xff]
        %v1165 = vld [vmem:[%s948 + $0xc2] sm:$0xff]
        %v1166 = vld [vmem:[%s948 + $0xca] sm:$0xff]
        %v1167 = vld [vmem:[%s948 + $0xda] sm:$0xff]
        %v1168 = vld [vmem:[%s948 + $0xe2] sm:$0xff]
        %v1169 = vld [vmem:[%s948 + $0xf2] sm:$0xff]
        %v1170 = vld [vmem:[%s948 + $0xfa] sm:$0xff]
        %v1171 = vld [vmem:[%s948 + $0x10a] sm:$0xff]
        %v1172 = vld [vmem:[%s948 + $0x112] sm:$0xff]
        %v1173 = vld [vmem:[%s948 + $0x122] sm:$0xff]
        %v1174 = vld [vmem:[%s948 + $0x12a] sm:$0xff]
        %v1175 = vld [vmem:[%s948 + $0x13a] sm:$0xff]
        %v1176 = vld [vmem:[%s948 + $0x142] sm:$0xff]
        %v1177 = vld [vmem:[%s948 + $0x152] sm:$0xff]
        %v1178 = vld [vmem:[%s948 + $0x15a] sm:$0xff]
        %v1179 = vld [vmem:[%s948 + $0x16a] sm:$0xff]
        %v1180 = vld [vmem:[%s948 + $0x172] sm:$0xff]
        %v1181 = vlaneseq
        %v1182 = vshrl.u32 %v1181, 7
        %v1183 = vsub.s32 2, %v1182
        %v1184 = vrot.slane %v378, %v1183
        %v1185 = vmul.f32 %v1149, %v1184
        %v1186 = vmul.f32 %v1150, %v1184
        %v1187 = vmul.f32 %v1151, %v1184
        %v1188 = vmul.f32 %v1152, %v1184
        %v1189 = vmul.f32 %v1153, %v1184
        %v1190 = vmul.f32 %v1154, %v1184
        %v1191 = vmul.f32 %v1155, %v1184
        %v1192 = vmul.f32 %v1156, %v1184
        %v1193 = vmul.f32 %v1157, %v1184
        %v1194 = vmul.f32 %v1158, %v1184
        %v1195 = vmul.f32 %v1159, %v1184
        %v1196 = vmul.f32 %v1160, %v1184
        %v1197 = vmul.f32 %v1161, %v1184
        %v1198 = vmul.f32 %v1162, %v1184
        %v1199 = vmul.f32 %v1163, %v1184
        %v1200 = vmul.f32 %v1164, %v1184
        %v1201 = vmul.f32 %v1165, %v1184
        %v1202 = vmul.f32 %v1166, %v1184
        %v1203 = vmul.f32 %v1167, %v1184
        %v1204 = vmul.f32 %v1168, %v1184
        %v1205 = vmul.f32 %v1169, %v1184
        %v1206 = vmul.f32 %v1170, %v1184
        %v1207 = vmul.f32 %v1171, %v1184
        %v1208 = vmul.f32 %v1172, %v1184
        %v1209 = vmul.f32 %v1173, %v1184
        %v1210 = vmul.f32 %v1174, %v1184
        %v1211 = vmul.f32 %v1175, %v1184
        %v1212 = vmul.f32 %v1176, %v1184
        %v1213 = vmul.f32 %v1177, %v1184
        %v1214 = vmul.f32 %v1178, %v1184
        %v1215 = vmul.f32 %v1179, %v1184
        %v1216 = vmul.f32 %v1180, %v1184
        %v1217 = vadd.f32 %v1117, %v1185
        %v1218 = vadd.f32 %v1118, %v1186
        %v1219 = vadd.f32 %v1119, %v1187
        %v1220 = vadd.f32 %v1120, %v1188
        %v1221 = vadd.f32 %v1121, %v1189
        %v1222 = vadd.f32 %v1122, %v1190
        %v1223 = vadd.f32 %v1123, %v1191
        %v1224 = vadd.f32 %v1124, %v1192
        %v1225 = vadd.f32 %v1125, %v1193
        %v1226 = vadd.f32 %v1126, %v1194
        %v1227 = vadd.f32 %v1127, %v1195
        %v1228 = vadd.f32 %v1128, %v1196
        %v1229 = vadd.f32 %v1129, %v1197
        %v1230 = vadd.f32 %v1130, %v1198
        %v1231 = vadd.f32 %v1131, %v1199
        %v1232 = vadd.f32 %v1132, %v1200
        %v1233 = vadd.f32 %v1133, %v1201
        %v1234 = vadd.f32 %v1134, %v1202
        %v1235 = vadd.f32 %v1135, %v1203
        %v1236 = vadd.f32 %v1136, %v1204
        %v1237 = vadd.f32 %v1137, %v1205
        %v1238 = vadd.f32 %v1138, %v1206
        %v1239 = vadd.f32 %v1139, %v1207
        %v1240 = vadd.f32 %v1140, %v1208
        %v1241 = vadd.f32 %v1141, %v1209
        %v1242 = vadd.f32 %v1142, %v1210
        %v1243 = vadd.f32 %v1143, %v1211
        %v1244 = vadd.f32 %v1144, %v1212
        %v1245 = vadd.f32 %v1145, %v1213
        %v1246 = vadd.f32 %v1146, %v1214
        %v1247 = vadd.f32 %v1147, %v1215
        %v1248 = vadd.f32 %v1148, %v1216
        %v1250 = vlaneseq
        %v1251 = vshrl.u32 %v1250, 7
        %v1252 = vsub.s32 0, %v1251
        %v1253 = vrot.slane %v379, %v1252
        %v1255 = vadd.f32 %v1217, %v1253
        %v1256 = vadd.f32 %v1218, %v1253
        %v1257 = vadd.f32 %v1219, %v1253
        %v1258 = vadd.f32 %v1220, %v1253
        %v1259 = vadd.f32 %v1221, %v1253
        %v1260 = vadd.f32 %v1222, %v1253
        %v1261 = vadd.f32 %v1223, %v1253
        %v1262 = vadd.f32 %v1224, %v1253
        %v1263 = vadd.f32 %v1225, %v1253
        %v1264 = vadd.f32 %v1226, %v1253
        %v1265 = vadd.f32 %v1227, %v1253
        %v1266 = vadd.f32 %v1228, %v1253
        %v1267 = vadd.f32 %v1229, %v1253
        %v1268 = vadd.f32 %v1230, %v1253
        %v1269 = vadd.f32 %v1231, %v1253
        %v1270 = vadd.f32 %v1232, %v1253
        %v1271 = vadd.f32 %v1233, %v1253
        %v1272 = vadd.f32 %v1234, %v1253
        %v1273 = vadd.f32 %v1235, %v1253
        %v1274 = vadd.f32 %v1236, %v1253
        %v1275 = vadd.f32 %v1237, %v1253
        %v1276 = vadd.f32 %v1238, %v1253
        %v1277 = vadd.f32 %v1239, %v1253
        %v1278 = vadd.f32 %v1240, %v1253
        %v1279 = vadd.f32 %v1241, %v1253
        %v1280 = vadd.f32 %v1242, %v1253
        %v1281 = vadd.f32 %v1243, %v1253
        %v1282 = vadd.f32 %v1244, %v1253
        %v1283 = vadd.f32 %v1245, %v1253
        %v1284 = vadd.f32 %v1246, %v1253
        %v1285 = vadd.f32 %v1247, %v1253
        %v1286 = vadd.f32 %v1248, %v1253
        %v1287 = vmax.f32 %v1255, 0.0
        %v1288 = vmax.f32 %v1256, 0.0
        %v1289 = vmax.f32 %v1257, 0.0
        %v1290 = vmax.f32 %v1258, 0.0
        %v1291 = vmax.f32 %v1259, 0.0
        %v1292 = vmax.f32 %v1260, 0.0
        %v1293 = vmax.f32 %v1261, 0.0
        %v1294 = vmax.f32 %v1262, 0.0
        %v1295 = vmax.f32 %v1263, 0.0
        %v1296 = vmax.f32 %v1264, 0.0
        %v1297 = vmax.f32 %v1265, 0.0
        %v1298 = vmax.f32 %v1266, 0.0
        %v1299 = vmax.f32 %v1267, 0.0
        %v1300 = vmax.f32 %v1268, 0.0
        %v1301 = vmax.f32 %v1269, 0.0
        %v1302 = vmax.f32 %v1270, 0.0
        %v1303 = vmax.f32 %v1271, 0.0
        %v1304 = vmax.f32 %v1272, 0.0
        %v1305 = vmax.f32 %v1273, 0.0
        %v1306 = vmax.f32 %v1274, 0.0
        %v1307 = vmax.f32 %v1275, 0.0
        %v1308 = vmax.f32 %v1276, 0.0
        %v1309 = vmax.f32 %v1277, 0.0
        %v1310 = vmax.f32 %v1278, 0.0
        %v1311 = vmax.f32 %v1279, 0.0
        %v1312 = vmax.f32 %v1280, 0.0
        %v1313 = vmax.f32 %v1281, 0.0
        %v1314 = vmax.f32 %v1282, 0.0
        %v1315 = vmax.f32 %v1283, 0.0
        %v1316 = vmax.f32 %v1284, 0.0
        %v1317 = vmax.f32 %v1285, 0.0
        %v1318 = vmax.f32 %v1286, 0.0
        %v1319 = vmin.f32 %v1287, 6.0
        %v1320 = vmin.f32 %v1288, 6.0
        %v1321 = vmin.f32 %v1289, 6.0
        %v1322 = vmin.f32 %v1290, 6.0
        %v1323 = vmin.f32 %v1291, 6.0
        %v1324 = vmin.f32 %v1292, 6.0
        %v1325 = vmin.f32 %v1293, 6.0
        %v1326 = vmin.f32 %v1294, 6.0
        %v1327 = vmin.f32 %v1295, 6.0
        %v1328 = vmin.f32 %v1296, 6.0
        %v1329 = vmin.f32 %v1297, 6.0
        %v1330 = vmin.f32 %v1298, 6.0
        %v1331 = vmin.f32 %v1299, 6.0
        %v1332 = vmin.f32 %v1300, 6.0
        %v1333 = vmin.f32 %v1301, 6.0
        %v1334 = vmin.f32 %v1302, 6.0
        %v1335 = vmin.f32 %v1303, 6.0
        %v1336 = vmin.f32 %v1304, 6.0
        %v1337 = vmin.f32 %v1305, 6.0
        %v1338 = vmin.f32 %v1306, 6.0
        %v1339 = vmin.f32 %v1307, 6.0
        %v1340 = vmin.f32 %v1308, 6.0
        %v1341 = vmin.f32 %v1309, 6.0
        %v1342 = vmin.f32 %v1310, 6.0
        %v1343 = vmin.f32 %v1311, 6.0
        %v1344 = vmin.f32 %v1312, 6.0
        %v1345 = vmin.f32 %v1313, 6.0
        %v1346 = vmin.f32 %v1314, 6.0
        %v1347 = vmin.f32 %v1315, 6.0
        %v1348 = vmin.f32 %v1316, 6.0
        %v1349 = vmin.f32 %v1317, 6.0
        %v1350 = vmin.f32 %v1318, 6.0
        %v1351 = vld [vmem:[%s3] sm:$0xff]
        %v1352 = vld [vmem:[%s3 + $0x8] sm:$0xff]
        %v1353 = vld [vmem:[%s4] sm:$0xff]
        %v1354 = vld [vmem:[%s4 + $0x8] sm:$0xff]
        %1356 = vset.pattern.permute.xlu0 0
        %1357 = vperm.xlu0 %1356, %v1353
        %v1358 = vpop.permute.xlu0 %1357
        %1361 = vset.pattern.permute.xlu0 0
        %1362 = vperm.xlu0 %1361, %v1354
        %v1363 = vpop.permute.xlu0 %1362
        %v1366 = vsel %vm300, %v1351, 0
        %v1369 = vsel %vm300, %v1352, 0
        %v1372 = vsel %vm300, %v1319, 0
        %v1375 = vsel %vm300, %v1320, 0
        %v1378 = vsel %vm300, %v1321, 0
        %v1381 = vsel %vm300, %v1322, 0
        %v1384 = vsel %vm300, %v1323, 0
        %v1387 = vsel %vm300, %v1324, 0
        %v1390 = vsel %vm300, %v1325, 0
        %v1393 = vsel %vm300, %v1326, 0
        %v1396 = vsel %vm300, %v1327, 0
        %v1399 = vsel %vm300, %v1328, 0
        %v1402 = vsel %vm300, %v1329, 0
        %v1405 = vsel %vm300, %v1330, 0
        %v1408 = vsel %vm300, %v1331, 0
        %v1411 = vsel %vm300, %v1332, 0
        %v1414 = vsel %vm300, %v1333, 0
        %v1417 = vsel %vm300, %v1334, 0
        %v1420 = vsel %vm300, %v1335, 0
        %v1423 = vsel %vm300, %v1336, 0
        %v1426 = vsel %vm300, %v1337, 0
        %v1429 = vsel %vm300, %v1338, 0
        %v1432 = vsel %vm300, %v1339, 0
        %v1435 = vsel %vm300, %v1340, 0
        %v1438 = vsel %vm300, %v1341, 0
        %v1441 = vsel %vm300, %v1342, 0
        %v1444 = vsel %vm300, %v1343, 0
        %v1447 = vsel %vm300, %v1344, 0
        %v1450 = vsel %vm300, %v1345, 0
        %v1453 = vsel %vm300, %v1346, 0
        %v1456 = vsel %vm300, %v1347, 0
        %v1459 = vsel %vm300, %v1348, 0
        %v1462 = vsel %vm300, %v1349, 0
        %v1465 = vsel %vm300, %v1350, 0
        %1467 = vmatprep.subr.mxu0 0.0
        %1468 = vmatpush1.xpose.msra.mxu0 %v1417
        %1469 = vmatprep.subr.mxu0 0.0
        %1470 = vmatpush1.xpose.msra.mxu0 %v1414
        %1471 = vmatprep.subr.mxu0 0.0
        %1472 = vmatpush1.xpose.msra.mxu0 %v1411
        %1473 = vmatprep.subr.mxu0 0.0
        %1474 = vmatpush1.xpose.msra.mxu0 %v1408
        %1475 = vmatprep.subr.mxu0 0.0
        %1476 = vmatpush1.xpose.msra.mxu0 %v1405
        %1477 = vmatprep.subr.mxu0 0.0
        %1478 = vmatpush1.xpose.msra.mxu0 %v1402
        %1479 = vmatprep.subr.mxu0 0.0
        %1480 = vmatpush1.xpose.msra.mxu0 %v1399
        %1481 = vmatprep.subr.mxu0 0.0
        %1482 = vmatpush1.xpose.msra.mxu0 %v1396
        %1483 = vmatprep.subr.mxu0 0.0
        %1484 = vmatpush1.xpose.msra.mxu0 %v1393
        %1485 = vmatprep.subr.mxu0 0.0
        %1486 = vmatpush1.xpose.msra.mxu0 %v1390
        %1487 = vmatprep.subr.mxu0 0.0
        %1488 = vmatpush1.xpose.msra.mxu0 %v1387
        %1489 = vmatprep.subr.mxu0 0.0
        %1490 = vmatpush1.xpose.msra.mxu0 %v1384
        %1491 = vmatprep.subr.mxu0 0.0
        %1492 = vmatpush1.xpose.msra.mxu0 %v1381
        %1493 = vmatprep.subr.mxu0 0.0
        %1494 = vmatpush1.xpose.msra.mxu0 %v1378
        %1495 = vmatprep.subr.mxu0 0.0
        %1496 = vmatpush1.xpose.msra.mxu0 %v1375
        %1497 = vmatprep.subr.mxu0 0.0
        %1498 = vmatpush1.xpose.msra.mxu0 %v1372
        %1499 = vmatprep.subr.mxu0 0.0
        %1500 = vmatpush2.xpose.msra.mxu0 %v1465
        %1501 = vmatprep.subr.mxu0 0.0
        %1502 = vmatpush2.xpose.msra.mxu0 %v1462
        %1503 = vmatprep.subr.mxu0 0.0
        %1504 = vmatpush2.xpose.msra.mxu0 %v1459
        %1505 = vmatprep.subr.mxu0 0.0
        %1506 = vmatpush2.xpose.msra.mxu0 %v1456
        %1507 = vmatprep.subr.mxu0 0.0
        %1508 = vmatpush2.xpose.msra.mxu0 %v1453
        %1509 = vmatprep.subr.mxu0 0.0
        %1510 = vmatpush2.xpose.msra.mxu0 %v1450
        %1511 = vmatprep.subr.mxu0 0.0
        %1512 = vmatpush2.xpose.msra.mxu0 %v1447
        %1513 = vmatprep.subr.mxu0 0.0
        %1514 = vmatpush2.xpose.msra.mxu0 %v1444
        %1515 = vmatprep.subr.mxu0 0.0
        %1516 = vmatpush2.xpose.msra.mxu0 %v1441
        %1517 = vmatprep.subr.mxu0 0.0
        %1518 = vmatpush2.xpose.msra.mxu0 %v1438
        %1519 = vmatprep.subr.mxu0 0.0
        %1520 = vmatpush2.xpose.msra.mxu0 %v1435
        %1521 = vmatprep.subr.mxu0 0.0
        %1522 = vmatpush2.xpose.msra.mxu0 %v1432
        %1523 = vmatprep.subr.mxu0 0.0
        %1524 = vmatpush2.xpose.msra.mxu0 %v1429
        %1525 = vmatprep.subr.mxu0 0.0
        %1526 = vmatpush2.xpose.msra.mxu0 %v1426
        %1527 = vmatprep.subr.mxu0 0.0
        %1528 = vmatpush2.xpose.msra.mxu0 %v1423
        %1529 = vmatprep.subr.mxu0 0.0
        %1530 = vmatpush2.xpose.msra.mxu0 %v1420
        %1531 = vmatprep.mubr.f32.mxu0 0.0
        %1532 = vmatmul.mubr.f32.gmra.mxu0 %v1366
        %v1533 = vpop.f32.mrf.mxu0
        %v1534 = vadd.f32 %v1358, %v1533
        %v1535 = vpop.f32.mrf.mxu0
        %v1536 = vadd.f32 %v1358, %v1535
        %1537 = vmatprep.mubr.f32.mxu0 0.0
        %1538 = vmatmul.mubr.f32.gmra.mxu0 %v1369
        %v1539 = vpop.f32.mrf.mxu0
        %v1540 = vadd.f32 %v1363, %v1539
        %v1541 = vpop.f32.mrf.mxu0
        %v1542 = vadd.f32 %v1363, %v1541
        %1543 = vdwg.mxu0
        %v1544 = vmax.f32 %v1534, 0.0
        %v1545 = vmax.f32 %v1536, 0.0
        %v1546 = vmax.f32 %v1540, 0.0
        %v1547 = vmax.f32 %v1542, 0.0
        %v1548 = vmin.f32 %v1544, 6.0
        %v1549 = vmin.f32 %v1545, 6.0
        %v1550 = vmin.f32 %v1546, 6.0
        %v1551 = vmin.f32 %v1547, 6.0
        %1552 = vst [vmem:[%s231] sm:$0xff] %v1548
        %1553 = vst [vmem:[%s231 + $0x8] sm:$0xff] %v1549
        %1554 = vst [vmem:[%s231 + $0x10] sm:$0xff] %v1550
        %1555 = vst [vmem:[%s231 + $0x18] sm:$0xff] %v1551
        %s1556 = sand.u32 %s151, 1
        %s1557 = scalar_lea.sflag [#allocation4], %s1556
        %s1558 = sand.u32 %s151, 1
        %s1559 = smul.addr %s1558, 32
        %s1560 = scalar_lea.vmem [#allocation3], %s1559
        // Predicated region
        $region41: #{tpu_custom_call.1} parent=39 // pred_check
          %p1561 = pneg %p161
        $region42: #{tpu_custom_call.1} parent=39 // pred_check_branch
          %1563 = sbr.rel (%p1561) target = $region44
        $region43: #{tpu_custom_call.1} parent=39 // pred_region
          %s1564 = smul.u32 2, %s24
          %s1566 = ssub.s32 512, 512
          %1567 = vsyncadd %s1557, %s1566
          %s1568 = smul.addr %s23, 4
          %s1569 = sadd.s32 %s1564, %s1568
          %s1570 = smul.addr %s1569, 128
          %s1571 = scalar_lea.hbm %s5, %s1570
          %s1572 = sshll.u32 %s1560, 4
          %s1573 = int_to_ptr.vmem [resolvable:$true] %s1572
          %1578 = dma.vmem_to_hbm [thread:$0]  %s1573, 512, %s1571, %s1557, 256, 256, 16
        $region44: #{tpu_custom_call.1} parent=39 // pred_fallthru
          _
      $region40: #{tpu_custom_call.1} parent=5 // pred_fallthru
        _
      %p1579 = scmp.le.s32.totalorder 2, %s14
      // Predicated region
      $region45: #{tpu_custom_call.1} parent=5 // pred_check
        %p1580 = pneg %p1579
      $region46: #{tpu_custom_call.1} parent=5 // pred_check_branch
        %1582 = sbr.rel (%p1580) target = $region48
      $region47: #{tpu_custom_call.1} parent=5 // pred_region
        %s1583 = ssub.s32 %s14, 2
        // Predicated region
        $region49: #{tpu_custom_call.1} parent=47 // pred_check
          %p1584 = pneg %p167
        $region50: #{tpu_custom_call.1} parent=47 // pred_check_branch
          %1586 = sbr.rel (%p1584) target = $region52
        $region51: #{tpu_custom_call.1} parent=47 // pred_region
          %s1587 = sand.u32 %s152, 1
          %s1588 = scalar_lea.sflag [#allocation4], %s1587
          %s1589 = sand.u32 %s152, 1
          %s1590 = smul.addr %s1589, 32
          %s1591 = scalar_lea.vmem [#allocation3], %s1590
          %1592 = dma.done %s1588, 512
        $region52: #{tpu_custom_call.1} parent=47 // pred_fallthru
          _
      $region48: #{tpu_custom_call.1} parent=5 // pred_fallthru
        _
    $region6: #{tpu_custom_call.1} parent=1 // loop_footer
      %s18 = sadd.s32 1, %s14
    $region7: #{tpu_custom_call.1} parent=1 // loop_footer_branch
      %13 = sbr.rel target = $region3
    $region8: #{tpu_custom_call.1} parent=1 // loop_exit
      _
    %1593 = vsyncpa [#allocation4], 1
    %s1594 = scalar_lea.sflag [#allocation4], 1
    %1595 = vsyncpa %s1594, 1

</llo_original>
